<compile_context>
chip_gen: v6e
topology: v6e:2x2x1
jax: 0.10.0
libtpu: 0.0.40
codegen_flags: <defaults>
</compile_context>

<pallas_src>
import functools

import jax
import jax.numpy as jnp
from jax.experimental import pallas as pl
from jax.experimental.pallas import tpu as pltpu


# ----------------------------- kernel -------------------------------------


def _ffn_kernel(x_ref, w12_ref, w3_ref, o_ref, *scratch):
    # x_ref  : (tm, E)     activation tile
    # w12_ref: (2, E, th)  [0] = fc1.weight.T chunk, [1] = fc2.weight.T chunk
    # w3_ref : (th, E)     fc3.weight.T chunk (hidden rows h*th:(h+1)*th)
    # o_ref  : (tm, E)     output tile (resident across the hidden axis)
    # scratch: optional (tm, E) f32 accumulator; omitted when the output is
    #          f32 and we accumulate directly into o_ref (saves VMEM).
    acc_ref = scratch[0] if scratch else o_ref
    h = pl.program_id(1)

    @pl.when(h == 0)
    def _():
        acc_ref[...] = jnp.zeros_like(acc_ref)

    x = x_ref[...]
    # (tm, E) @ (E, th) -> (tm, th); operand-dtype MXU with f32 accumulation.
    h1 = jnp.dot(x, w12_ref[0], preferred_element_type=jnp.float32)
    h2 = jnp.dot(x, w12_ref[1], preferred_element_type=jnp.float32)

    # SwiGLU gate in f32 (VPU mul + EUP exp), independent of operand dtype.
    g = (h1 * jax.nn.sigmoid(h1)) * h2

    # Partial fc3: (tm, th) @ (th, E) -> (tm, E), accumulated over hidden tiles.
    acc_ref[...] += jnp.dot(g.astype(w3_ref.dtype), w3_ref[...],
                            preferred_element_type=jnp.float32)

    if acc_ref is not o_ref:  # static check: separate f32 scratch in use
        @pl.when(h == pl.num_programs(1) - 1)
        def _():
            o_ref[...] = acc_ref[...].astype(o_ref.dtype)


# ------------------------- tile / budget selection -------------------------


def _round_up(v, m):
    return (v + m - 1) // m * m


def _cdiv(a, b):
    return (a + b - 1) // b


@functools.lru_cache(maxsize=None)
def _vmem_budget_bytes():
    """Per-kernel VMEM budget, generation aware (leave Mosaic headroom)."""
    try:
        cap = int(pltpu.get_tpu_info().vmem_capacity_bytes)
    except Exception:
        cap = 64 * 1024 * 1024
    if cap >= 96 * 1024 * 1024:       # v5e / v6e: 128 MiB physical VMEM
        return 100 * 1024 * 1024
    return cap // 8 * 7               # v7x: ~56 of 64 MiB


@functools.lru_cache(maxsize=None)
def _megacore_factor():
    """TensorCores behind one Pallas-visible device (v4/v5p/v7x: 2)."""
    try:
        kind = jax.devices()[0].device_kind.lower()
    except Exception:
        return 1
    return 2 if any(t in kind for t in ("v4", "v5p", "v7", "7x")) else 1


def _vmem_need(tm, th, E, itemsize, acc_bytes):
    return (4 * tm * E * itemsize          # x + out tiles, double-buffered
            + 6 * th * E * itemsize        # w12 (2*E*th) + w3 (th*E), 2 buffers
            + acc_bytes                    # resident f32 accumulator (if any)
            + 4 * (3 * tm * th + tm * E))  # f32 gate temps + fc3 partial


def _pick_hidden_tile(H, tm, E, itemsize, acc_bytes, budget):
    """Largest hidden tile that divides H exactly, is layout-legal, and fits."""
    upper = min(H, 2048) // 128 * 128
    cands = [t for t in range(upper, 0, -128) if H % t == 0]
    if H not in cands:
        cands.append(H)                    # full-extent block is always legal
    for t in sorted(cands, reverse=True):
        if _vmem_need(tm, t, E, itemsize, acc_bytes) <= budget:
            return t
    return None


def _pick_tiles(M, E, H, itemsize, out_is_f32, budget, mega):
    sub = 8 if itemsize >= 4 else 16
    # Weight-streaming arithmetic intensity is 2*tm/itemsize FLOP/byte; pick
    # tm large enough to clear the HBM roofline (v5e ~240, v7x ~310,
    # v6e ~675 FLOP/byte).  v7x (64 MiB VMEM) uses the smaller bf16 cap.
    if itemsize >= 4:
        tm_cap = 256
    else:
        tm_cap = 768 if budget >= 96 * 1024 * 1024 else 512
    tm = min(tm_cap, _round_up(M, sub))

    # Megacore: give each TensorCore a token tile, but only when the halved
    # tile stays compute-bound -- every extra token tile re-streams all the
    # weights, so splitting in the weight-BW-bound regime is a net loss.
    if mega > 1 and _cdiv(M, tm) < mega:
        tm_half = _round_up(max(sub, _cdiv(tm, mega)), sub)
        if 2 * tm_half // itemsize >= 640:
            tm = tm_half

    th = None
    while True:
        acc_bytes = 0 if out_is_f32 else tm * E * 4
        th = _pick_hidden_tile(H, tm, E, itemsize, acc_bytes, budget)
        if th is not None or tm <= sub:
            break
        tm = _round_up(max(sub, tm // 2), sub)  # only shrink tm if no th fits
    if th is None:
        # Pathological case: ignore the budget and let vmem_limit absorb it.
        th = _pick_hidden_tile(H, tm, E, itemsize, acc_bytes, float("inf")) or H
    return tm, th


# ------------------------------ wrappers -----------------------------------


def prepare_ffn_weights(w1, w2, w3):
    """One-time (model init) re-layout from PyTorch nn.Linear weights.

    w1, w2: (H, E) = fc1.weight / fc2.weight;  w3: (E, H) = fc3.weight.
    Returns w12: (2, E, H) with w12[0]=w1.T, w12[1]=w2.T, and w3t: (H, E).
    """
    return jnp.stack([w1.T, w2.T], axis=0), w3.T


@jax.jit
def feed_forward_prepared(x, w12, w3t):
    """x: (..., E); w12: (2, E, H); w3t: (H, E)."""
    E = x.shape[-1]
    H = w3t.shape[0]
    M = 1
    for d in x.shape[:-1]:
        M *= d
    itemsize = jnp.dtype(x.dtype).itemsize
    out_is_f32 = jnp.dtype(x.dtype) == jnp.dtype(jnp.float32)

    budget = _vmem_budget_bytes()
    mega = _megacore_factor()
    tm, th = _pick_tiles(M, E, H, itemsize, out_is_f32, budget, mega)

    x2d = x.reshape(M, E)
    grid = (_cdiv(M, tm), H // th)   # ragged M: masked edge blocks, no pad copy
    n_tok_tiles = grid[0]

    cost = pl.CostEstimate(
        flops=6 * M * E * H,                        # 3 matmuls, 2 FLOP / MAC
        transcendentals=2 * M * H,                  # sigmoid ~= exp + recip
        bytes_accessed=(2 * M * E * itemsize        # read x, write out
                        + 3 * H * E * itemsize * n_tok_tiles),  # weight re-reads
    )

    scratch = [] if out_is_f32 else [pltpu.VMEM((tm, E), jnp.float32)]

    out2d = pl.pallas_call(
        _ffn_kernel,
        out_shape=jax.ShapeDtypeStruct((M, E), x.dtype),
        grid_spec=pltpu.PrefetchScalarGridSpec(
            num_scalar_prefetch=0,
            grid=grid,
            in_specs=[
                pl.BlockSpec((tm, E), lambda i, h: (i, 0)),        # x tile
                pl.BlockSpec((2, E, th), lambda i, h: (0, 0, h)),  # fc1/fc2 chunk
                pl.BlockSpec((th, E), lambda i, h: (h, 0)),        # fc3 chunk
            ],
            out_specs=pl.BlockSpec((tm, E), lambda i, h: (i, 0)),
            scratch_shapes=scratch,
        ),
        compiler_params=pltpu.CompilerParams(
            dimension_semantics=("parallel", "arbitrary"),
            vmem_limit_bytes=int(budget),
        ),
        cost_estimate=cost,
    )(x2d, w12, w3t)

    return out2d.reshape(x.shape)


@jax.jit
def feed_forward(x, w1, w2, w3):
    """Convenience wrapper taking PyTorch-layout weights.  Real models should
    call prepare_ffn_weights once at init and use feed_forward_prepared."""
    w12, w3t = prepare_ffn_weights(w1, w2, w3)
    return feed_forward_prepared(x, w12, w3t)


# ------------------------------ reference ----------------------------------


def _reference(x, w1, w2, w3):
    xf = x.astype(jnp.float32)
    h1 = jnp.einsum("bse,he->bsh", xf, w1.astype(jnp.float32))
    h2 = jnp.einsum("bse,he->bsh", xf, w2.astype(jnp.float32))
    g = jax.nn.silu(h1) * h2
    return jnp.einsum("bsh,eh->bse", g, w3.astype(jnp.float32))


if __name__ == "__main__":
    # f32 case: emb_dim=128, hidden_dim=256; M=320 > token tile -> exercises
    # multiple token tiles + a masked edge block + accumulate-into-output.
    B, S, E, H = 2, 160, 128, 256
    key = jax.random.PRNGKey(0)
    kx, k1, k2, k3 = jax.random.split(key, 4)

    x = jax.random.normal(kx, (B, S, E), dtype=jnp.float32)
    w1 = jax.random.normal(k1, (H, E), dtype=jnp.float32) * 0.02  # fc1.weight
    w2 = jax.random.normal(k2, (H, E), dtype=jnp.float32) * 0.02  # fc2.weight
    w3 = jax.random.normal(k3, (E, H), dtype=jnp.float32) * 0.02  # fc3.weight

    w12, w3t = prepare_ffn_weights(w1, w2, w3)   # one-time init re-layout
    out = jax.block_until_ready(feed_forward_prepared(x, w12, w3t))
    ref = _reference(x, w1, w2, w3)
    assert out.shape == (B, S, E)
    assert jnp.allclose(out, ref, atol=1e-4, rtol=1e-4), "f32 mismatch vs reference"

    # bf16 case with a ragged token count (exercises masked edge block with an
    # f32 accumulator scratch), via the PyTorch-layout convenience wrapper.
    Bb, Sb, Eb, Hb = 2, 49, 128, 384
    kxb, k1b, k2b, k3b = jax.random.split(jax.random.PRNGKey(1), 4)
    xb = jax.random.normal(kxb, (Bb, Sb, Eb), dtype=jnp.float32).astype(jnp.bfloat16)
    w1b = (jax.random.normal(k1b, (Hb, Eb), dtype=jnp.float32) * 0.02).astype(jnp.bfloat16)
    w2b = (jax.random.normal(k2b, (Hb, Eb), dtype=jnp.float32) * 0.02).astype(jnp.bfloat16)
    w3b = (jax.random.normal(k3b, (Eb, Hb), dtype=jnp.float32) * 0.02).astype(jnp.bfloat16)

    outb = jax.block_until_ready(feed_forward(xb, w1b, w2b, w3b))
    refb = _reference(xb, w1b, w2b, w3b)
    assert outb.shape == (Bb, Sb, Eb)
    assert jnp.allclose(outb.astype(jnp.float32), refb, atol=5e-2, rtol=5e-2), \
        "bf16 mismatch vs reference"

    print("KERNEL_OK")
</pallas_src>

<mosaic_0001>
module attributes {stable_mosaic.version = 11 : i64} {
  func.func @_ffn_kernel(%arg0: i32, %arg1: i32, %arg2: memref<256x128xf32, #tpu.memory_space<vmem>>, %arg3: memref<2x128x256xf32, #tpu.memory_space<vmem>>, %arg4: memref<256x128xf32, #tpu.memory_space<vmem>>, %arg5: memref<256x128xf32, #tpu.memory_space<vmem>>) attributes {dimension_semantics = [#tpu.dimension_semantics<parallel>, #tpu.dimension_semantics<arbitrary>], iteration_bounds = array<i64: 2, 1>, scalar_prefetch = 0 : i64, scratch_operands = 0 : i64, tpu.core_type = #tpu.core_type<tc>, window_params = [{transform_indices = @transform_0, window_bounds = array<i64: 256, 128>}, {transform_indices = @transform_1, window_bounds = array<i64: 2, 128, 256>}, {transform_indices = @transform_2, window_bounds = array<i64: 256, 128>}, {transform_indices = @transform_3, window_bounds = array<i64: 256, 128>}]} {
    %c0_i32 = arith.constant 0 : i32
    %0 = arith.cmpi eq, %arg1, %c0_i32 : i32
    %1 = arith.extui %0 : i1 to i32
    %c0_i32_0 = arith.constant 0 : i32
    %2 = arith.cmpi ne, %1, %c0_i32_0 : i32
    scf.if %2 {
      %cst_16 = arith.constant 0.000000e+00 : f32
      %22 = vector.broadcast %cst_16 : f32 to vector<256x128xf32>
      %c0_17 = arith.constant 0 : index
      %c0_18 = arith.constant 0 : index
      %23 = vector.load %arg5[%c0_17, %c0_18] : memref<256x128xf32, #tpu.memory_space<vmem>>, vector<256x128xf32>
      tpu.vector_store %arg5[%c0_17, %c0_18], %22 {strides = array<i32>} : memref<256x128xf32, #tpu.memory_space<vmem>>, vector<256x128xf32>,
    } else {
    }
    %c0 = arith.constant 0 : index
    %c0_1 = arith.constant 0 : index
    %3 = vector.load %arg2[%c0, %c0_1] : memref<256x128xf32, #tpu.memory_space<vmem>>, vector<256x128xf32>
    %c0_2 = arith.constant 0 : index
    %c0_3 = arith.constant 0 : index
    %c0_4 = arith.constant 0 : index
    %4 = vector.load %arg3[%c0_2, %c0_3, %c0_4] : memref<2x128x256xf32, #tpu.memory_space<vmem>>, vector<1x128x256xf32>
    %5 = vector.shape_cast %4 : vector<1x128x256xf32> to vector<128x256xf32>
    %cst = arith.constant dense<0.000000e+00> : vector<256x256xf32>
    %6 = tpu.matmul %3, %5, %cst {dimension_numbers = #tpu.dot_dimension_numbers<[1], [0], [0], [1], [0, 0, 1, 1], [], []>} : vector<256x128xf32>, vector<128x256xf32>, vector<256x256xf32> -> vector<256x256xf32>
    %c1 = arith.constant 1 : index
    %c0_5 = arith.constant 0 : index
    %c0_6 = arith.constant 0 : index
    %7 = vector.load %arg3[%c1, %c0_5, %c0_6] : memref<2x128x256xf32, #tpu.memory_space<vmem>>, vector<1x128x256xf32>
    %8 = vector.shape_cast %7 : vector<1x128x256xf32> to vector<128x256xf32>
    %cst_7 = arith.constant dense<0.000000e+00> : vector<256x256xf32>
    %9 = tpu.matmul %3, %8, %cst_7 {dimension_numbers = #tpu.dot_dimension_numbers<[1], [0], [0], [1], [0, 0, 1, 1], [], []>} : vector<256x128xf32>, vector<128x256xf32>, vector<256x256xf32> -> vector<256x256xf32>
    %10 = arith.negf %6 : vector<256x256xf32>
    %11 = math.exp %10 : vector<256x256xf32>
    %cst_8 = arith.constant 1.000000e+00 : f32
    %12 = vector.broadcast %cst_8 : f32 to vector<256x256xf32>
    %13 = arith.addf %12, %11 : vector<256x256xf32>
    %14 = arith.divf %12, %13 : vector<256x256xf32>
    %15 = arith.mulf %6, %14 : vector<256x256xf32>
    %16 = arith.mulf %15, %9 : vector<256x256xf32>
    %c0_9 = arith.constant 0 : index
    %c0_10 = arith.constant 0 : index
    %17 = vector.load %arg5[%c0_9, %c0_10] : memref<256x128xf32, #tpu.memory_space<vmem>>, vector<256x128xf32>
    %c0_11 = arith.constant 0 : index
    %c0_12 = arith.constant 0 : index
    %18 = vector.load %arg4[%c0_11, %c0_12] : memref<256x128xf32, #tpu.memory_space<vmem>>, vector<256x128xf32>
    %cst_13 = arith.constant dense<0.000000e+00> : vector<256x128xf32>
    %19 = tpu.matmul %16, %18, %cst_13 {dimension_numbers = #tpu.dot_dimension_numbers<[1], [0], [0], [1], [0, 0, 1, 1], [], []>} : vector<256x256xf32>, vector<256x128xf32>, vector<256x128xf32> -> vector<256x128xf32>
    %20 = arith.addf %17, %19 : vector<256x128xf32>
    %c0_14 = arith.constant 0 : index
    %c0_15 = arith.constant 0 : index
    %21 = vector.load %arg5[%c0_14, %c0_15] : memref<256x128xf32, #tpu.memory_space<vmem>>, vector<256x128xf32>
    tpu.vector_store %arg5[%c0_14, %c0_15], %20 {strides = array<i32>} : memref<256x128xf32, #tpu.memory_space<vmem>>, vector<256x128xf32>,
    return
  }
  func.func @transform_0(%arg0: i32, %arg1: i32) -> (i32, i32) {
    %c0_i32 = arith.constant 0 : i32
    %c0_i32_0 = arith.constant 0 : i32
    return %arg0, %c0_i32 : i32, i32
  }
  func.func @transform_1(%arg0: i32, %arg1: i32) -> (i32, i32, i32) {
    %c0_i32 = arith.constant 0 : i32
    %c0_i32_0 = arith.constant 0 : i32
    %c0_i32_1 = arith.constant 0 : i32
    return %c0_i32, %c0_i32_0, %arg1 : i32, i32, i32
  }
  func.func @transform_2(%arg0: i32, %arg1: i32) -> (i32, i32) {
    %c0_i32 = arith.constant 0 : i32
    %c0_i32_0 = arith.constant 0 : i32
    return %arg1, %c0_i32 : i32, i32
  }
  func.func @transform_3(%arg0: i32, %arg1: i32) -> (i32, i32) {
    %c0_i32 = arith.constant 0 : i32
    %c0_i32_0 = arith.constant 0 : i32
    return %arg0, %c0_i32 : i32, i32
  }
}

</mosaic_0001>

<llo_original>
// kernel: feed_forward_prepared.1
$region0: #{feed_forward_prepared.1}
  #allocation0 [shape = 'u32[]', space=smem, size = 0x4, offset = 0x4, fixed_abs, tag = 'smem constant byte address 0x4 - core index']
  #allocation1 [shape = 'u32[144,128]{1,0:T(1,128)}', space=vmem, size = 0x12000, scoped, tag = 'internal scratch']
  %s0 = inlined_call_operand.hbm [shape: f32[320,128], index: 0, kind: input, shape index: {}]
  %s1 = inlined_call_operand.hbm [shape: f32[2,128,256], index: 1, kind: input, shape index: {}]
  %s2 = inlined_call_operand.hbm [shape: f32[256,128], index: 2, kind: input, shape index: {}]
  %s3 = inlined_call_operand.hbm [shape: f32[320,128], index: 3, kind: output, shape index: {}]
  %s4 = sld [smem:[#allocation0]]
  $region61: #{feed_forward_prepared.1} parent=0
    _
  %s6 = ssub.s32 1, %s4
  %s7 = scalar_select 0, %s6, %s4
  $region1: #{feed_forward_prepared.1} parent=0
    #allocation2 [shape = 'u8[262144]{0}', space=vmem, size = 0x40000, scoped, tag = 'input window, operand 0']
    #allocation3 [shape = 's32[2]{0}', space=sflag, size = 0x8, scoped, tag = 'scoped memory for feed_forward_prepared.1']
    #allocation4 [shape = 's32[2]{0}', space=sflag, size = 0x8, scoped, tag = 'scoped memory for feed_forward_prepared.1']
    #allocation5 [shape = 'u8[262144]{0}', space=vmem, size = 0x40000, scoped, tag = 'input window, operand 1, single buffered']
    #allocation6 [shape = 's32[1]{0}', space=sflag, size = 0x4, scoped, tag = 'scoped memory for feed_forward_prepared.1']
    #allocation7 [shape = 'u8[131072]{0}', space=vmem, size = 0x20000, scoped, tag = 'input window, operand 2, single buffered']
    #allocation8 [shape = 'u8[262144]{0}', space=vmem, size = 0x40000, scoped, tag = 'output window, operand 0']
    %8 = vsyncpa [#allocation3], 0
    %s9 = scalar_lea.sflag [#allocation3], 1
    %10 = vsyncpa %s9, 0
    %11 = vsyncpa [#allocation6], 0
    %12 = vsyncpa [#allocation4], 0
    %s13 = scalar_lea.sflag [#allocation4], 1
    %14 = vsyncpa %s13, 0
    loop: start=0, step=1, limit=4
    $region2: #{feed_forward_prepared.1} parent=1 // loop_pre_header
      _
    $region3: #{feed_forward_prepared.1} parent=1 // loop_header
      %s16 = sphi 0, %s20
      %p17 = scmp.ge.s32.totalorder %s16, 4
      %s23 = sphi 0, %s35
      %s24 = sphi 0, %s31
      %s25 = sphi 0, %s23
      %s26 = sphi 0, %s24
      %s27 = sphi 0, %s25
      %s28 = sphi 0, %s26
      %s38 = sphi 0, %s40
      %s41 = sphi 0, %s38
      %s42 = sphi 0, %s41
      %s58 = sphi 0, %s42
      %s64 = sphi 0, %s66
      %s67 = sphi 0, %s64
      %s68 = sphi 0, %s67
      %s84 = sphi 0, %s68
      %s90 = sphi 0, %s92
      %s93 = sphi 0, %s90
      %s94 = sphi 0, %s93
      %s110 = sphi 0, %s94
      %s116 = sphi 0, %s118
      %s119 = sphi 0, %s116
      %s120 = sphi 0, %s119
      %s136 = sphi 0, %s120
    $region4: #{feed_forward_prepared.1} parent=1 // loop_header_branch
      %19 = sbr.rel (%p17) target = $region8
    $region5: #{feed_forward_prepared.1} parent=1 // loop_body
      %s21 = ssub.s32 %s16, 1
      %s22 = ssub.s32 %s16, 2
      %s29 = sadd.s32 1, %s24
      %p30 = scmp.ge.s32.totalorder %s29, 1
      %s31 = scalar_select %p30, 0, %s29
      %s32 = sadd.s32 1, %s23
      %s33 = scalar_select %p30, %s32, %s23
      %p34 = scmp.ge.s32.totalorder %s33, 2
      %s35 = scalar_select %p34, 0, %s33
      %s36 = ssub.s32 %s23, %s35
      %p37 = scmp.eq.s32.totalorder %s36, 0
      %s39 = sadd.s32 %s38, 1
      %s40 = scalar_select %p37, %s38, %s39
      %p43 = pneg %p37
      %p44 = scmp.eq.s32.totalorder %s16, 1
      %p45 = por %p43, %p44
      %p46 = scmp.ne.s32.totalorder %s38, %s41
      %p47 = scmp.eq.s32.totalorder %s16, 0
      %p48 = por %p46, %p47
      %p49 = scmp.ne.s32.totalorder %s38, %s41
      %p50 = scmp.eq.s32.totalorder %s21, 1
      %p51 = por %p49, %p50
      %p52 = scmp.ne.s32.totalorder %s41, %s42
      %p53 = scmp.eq.s32.totalorder %s21, 0
      %p54 = por %p52, %p53
      %p55 = scmp.ne.s32.totalorder %s41, %s42
      %p56 = scmp.eq.s32.totalorder %s22, 1
      %p57 = por %p55, %p56
      %p59 = scmp.ne.s32.totalorder %s42, %s58
      %p60 = scmp.eq.s32.totalorder %s22, 0
      %p61 = por %p59, %p60
      %s62 = ssub.s32 %s24, %s31
      %p63 = scmp.eq.s32.totalorder %s62, 0
      %s65 = sadd.s32 %s64, 1
      %s66 = scalar_select %p63, %s64, %s65
      %p69 = pneg %p63
      %p70 = scmp.eq.s32.totalorder %s16, 1
      %p71 = por %p69, %p70
      %p72 = scmp.ne.s32.totalorder %s64, %s67
      %p73 = scmp.eq.s32.totalorder %s16, 0
      %p74 = por %p72, %p73
      %p75 = scmp.ne.s32.totalorder %s64, %s67
      %p76 = scmp.eq.s32.totalorder %s21, 1
      %p77 = por %p75, %p76
      %p78 = scmp.ne.s32.totalorder %s67, %s68
      %p79 = scmp.eq.s32.totalorder %s21, 0
      %p80 = por %p78, %p79
      %p81 = scmp.ne.s32.totalorder %s67, %s68
      %p82 = scmp.eq.s32.totalorder %s22, 1
      %p83 = por %p81, %p82
      %p85 = scmp.ne.s32.totalorder %s68, %s84
      %p86 = scmp.eq.s32.totalorder %s22, 0
      %p87 = por %p85, %p86
      %s88 = ssub.s32 %s24, %s31
      %p89 = scmp.eq.s32.totalorder %s88, 0
      %s91 = sadd.s32 %s90, 1
      %s92 = scalar_select %p89, %s90, %s91
      %p95 = pneg %p89
      %p96 = scmp.eq.s32.totalorder %s16, 1
      %p97 = por %p95, %p96
      %p98 = scmp.ne.s32.totalorder %s90, %s93
      %p99 = scmp.eq.s32.totalorder %s16, 0
      %p100 = por %p98, %p99
      %p101 = scmp.ne.s32.totalorder %s90, %s93
      %p102 = scmp.eq.s32.totalorder %s21, 1
      %p103 = por %p101, %p102
      %p104 = scmp.ne.s32.totalorder %s93, %s94
      %p105 = scmp.eq.s32.totalorder %s21, 0
      %p106 = por %p104, %p105
      %p107 = scmp.ne.s32.totalorder %s93, %s94
      %p108 = scmp.eq.s32.totalorder %s22, 1
      %p109 = por %p107, %p108
      %p111 = scmp.ne.s32.totalorder %s94, %s110
      %p112 = scmp.eq.s32.totalorder %s22, 0
      %p113 = por %p111, %p112
      %s114 = ssub.s32 %s23, %s35
      %p115 = scmp.eq.s32.totalorder %s114, 0
      %s117 = sadd.s32 %s116, 1
      %s118 = scalar_select %p115, %s116, %s117
      %p121 = pneg %p115
      %p122 = scmp.eq.s32.totalorder %s16, 1
      %p123 = por %p121, %p122
      %p124 = scmp.ne.s32.totalorder %s116, %s119
      %p125 = scmp.eq.s32.totalorder %s16, 0
      %p126 = por %p124, %p125
      %p127 = scmp.ne.s32.totalorder %s116, %s119
      %p128 = scmp.eq.s32.totalorder %s21, 1
      %p129 = por %p127, %p128
      %p130 = scmp.ne.s32.totalorder %s119, %s120
      %p131 = scmp.eq.s32.totalorder %s21, 0
      %p132 = por %p130, %p131
      %p133 = scmp.ne.s32.totalorder %s119, %s120
      %p134 = scmp.eq.s32.totalorder %s22, 1
      %p135 = por %p133, %p134
      %p137 = scmp.ne.s32.totalorder %s120, %s136
      %p138 = scmp.eq.s32.totalorder %s22, 0
      %p139 = por %p137, %p138
      %p140 = scmp.le.s32.totalorder 1, %s16
      %p141 = scmp.lt.s32.totalorder %s16, 3
      %p142 = pnand %p140, %p141
      %p143 = pneg %p142
      // Predicated region
      $region9: #{feed_forward_prepared.1} parent=5 // pred_check
        _
      $region10: #{feed_forward_prepared.1} parent=5 // pred_check_branch
        %145 = sbr.rel (%p142) target = $region12
      $region11: #{feed_forward_prepared.1} parent=5 // pred_region
        %s146 = ssub.s32 %s16, 1
        // Predicated region
        $region13: #{feed_forward_prepared.1} parent=11 // pred_check
          %p147 = pneg %p80
        $region14: #{feed_forward_prepared.1} parent=11 // pred_check_branch
          %149 = sbr.rel (%p147) target = $region16
        $region15: #{feed_forward_prepared.1} parent=11 // pred_region
          %s150 = smul.u32 2, %s26
          %s152 = ssub.s32 8192, 8192
          %153 = vsyncadd [#allocation6], %s152
          %s154 = smul.addr %s150, 128
          %s155 = scalar_lea.hbm %s1, %s154
          %s156 = sshll.u32 [#allocation5], 4
          %s157 = int_to_ptr.vmem [resolvable:$true] %s156
          %162 = dma.hbm_to_vmem [thread:$0]  %s155, 8192, %s157, [#allocation6], 256, 256, 16
        $region16: #{feed_forward_prepared.1} parent=11 // pred_fallthru
          _
        // Predicated region
        $region17: #{feed_forward_prepared.1} parent=11 // pred_check
          %p163 = pneg %p106
        $region18: #{feed_forward_prepared.1} parent=11 // pred_check_branch
          %165 = sbr.rel (%p163) target = $region20
        $region19: #{feed_forward_prepared.1} parent=11 // pred_region
          %s166 = smul.u32 32, %s26
          %s168 = ssub.s32 4096, 4096
          %169 = vsyncadd [#allocation6], %s168
          %s170 = smul.addr %s166, 128
          %s171 = scalar_lea.hbm %s2, %s170
          %s172 = sshll.u32 [#allocation7], 4
          %s173 = int_to_ptr.vmem [resolvable:$true] %s172
          %178 = dma.hbm_to_vmem [thread:$0]  %s171, 4096, %s173, [#allocation6], 128, 128, 8
        $region20: #{feed_forward_prepared.1} parent=11 // pred_fallthru
          _
      $region12: #{feed_forward_prepared.1} parent=5 // pred_fallthru
        _
      %p179 = scmp.lt.s32.totalorder %s16, 2
      // Predicated region
      $region21: #{feed_forward_prepared.1} parent=5 // pred_check
        %p180 = pneg %p179
      $region22: #{feed_forward_prepared.1} parent=5 // pred_check_branch
        %182 = sbr.rel (%p180) target = $region24
      $region23: #{feed_forward_prepared.1} parent=5 // pred_region
        // Predicated region
        $region25: #{feed_forward_prepared.1} parent=23 // pred_check
          %p183 = pneg %p48
        $region26: #{feed_forward_prepared.1} parent=23 // pred_check_branch
          %185 = sbr.rel (%p183) target = $region28
        $region27: #{feed_forward_prepared.1} parent=23 // pred_region
          %s186 = sand.u32 %s38, 1
          %s187 = scalar_lea.sflag [#allocation3], %s186
          %s188 = sand.u32 %s38, 1
          %s189 = smul.addr %s188, 256
          %s190 = scalar_lea.vmem [#allocation2], %s189
          %s191 = smul.u32 32, %s23
          %s192 = ssub.s32 40, %s191
          %p193 = scmp.lt.s32.totalorder %s192, 32
          %s194 = scalar_select %p193, %s192, 32
          %s195 = smul.u32 128, %s194
          %s197 = ssub.s32 4096, %s195
          %198 = vsyncadd %s187, %s197
          %p199 = scmp.ne.s32.totalorder 0, %s195
          %s200 = smul.addr %s191, 128
          %s201 = scalar_lea.hbm %s0, %s200
          %s202 = smul.u32 8, %s194
          %s203 = sshll.u32 %s190, 4
          %s204 = int_to_ptr.vmem [resolvable:$true] %s203
          %s205 = sshll.u32 %s202, 4
          %209 = dma.hbm_to_vmem [thread:$0]  (%p199), %s201, %s205, %s204, %s187, 128, 128, 8
        $region28: #{feed_forward_prepared.1} parent=23 // pred_fallthru
          _
      $region24: #{feed_forward_prepared.1} parent=5 // pred_fallthru
        _
      %p210 = scmp.le.s32.totalorder 1, %s16
      %p211 = scmp.lt.s32.totalorder %s16, 3
      %p212 = pnand %p210, %p211
      %p213 = pneg %p212
      // Predicated region
      $region29: #{feed_forward_prepared.1} parent=5 // pred_check
        _
      $region30: #{feed_forward_prepared.1} parent=5 // pred_check_branch
        %215 = sbr.rel (%p212) target = $region32
      $region31: #{feed_forward_prepared.1} parent=5 // pred_region
        %s216 = ssub.s32 %s16, 1
        %s217 = sand.u32 %s41, 1
        %s218 = scalar_lea.sflag [#allocation3], %s217
        %s219 = sand.u32 %s41, 1
        %s220 = smul.addr %s219, 256
        %s221 = scalar_lea.vmem [#allocation2], %s220
        // Predicated region
        $region33: #{feed_forward_prepared.1} parent=31 // pred_check
          %p222 = pneg %p54
        $region34: #{feed_forward_prepared.1} parent=31 // pred_check_branch
          %224 = sbr.rel (%p222) target = $region36
        $region35: #{feed_forward_prepared.1} parent=31 // pred_region
          %225 = dma.done %s218, 4096
        $region36: #{feed_forward_prepared.1} parent=31 // pred_fallthru
          _
        // Predicated region
        $region37: #{feed_forward_prepared.1} parent=31 // pred_check
          %p226 = pneg %p80
        $region38: #{feed_forward_prepared.1} parent=31 // pred_check_branch
          %228 = sbr.rel (%p226) target = $region40
        $region39: #{feed_forward_prepared.1} parent=31 // pred_region
          %229 = dma.done [#allocation6], 8192
        $region40: #{feed_forward_prepared.1} parent=31 // pred_fallthru
          _
        // Predicated region
        $region41: #{feed_forward_prepared.1} parent=31 // pred_check
          %p230 = pneg %p106
        $region42: #{feed_forward_prepared.1} parent=31 // pred_check_branch
          %232 = sbr.rel (%p230) target = $region44
        $region43: #{feed_forward_prepared.1} parent=31 // pred_region
          %233 = dma.done [#allocation6], 4096
        $region44: #{feed_forward_prepared.1} parent=31 // pred_fallthru
          _
        %s234 = sand.u32 %s41, 1
        %s235 = scalar_lea.sflag [#allocation3], %s234
        %s236 = sand.u32 %s41, 1
        %s237 = smul.addr %s236, 256
        %s238 = scalar_lea.vmem [#allocation2], %s237
        %p239 = pneg %p54
        %p240 = pneg %p51
        %p241 = pneg %p80
        %p242 = pneg %p77
        %p243 = pneg %p106
        %p244 = pneg %p103
        %p245 = pneg %p132
        %p246 = pneg %p129
        %s247 = sand.u32 %s119, 1
        %s248 = scalar_lea.sflag [#allocation4], %s247
        %s249 = sand.u32 %s119, 1
        %s250 = smul.addr %s249, 256
        %s251 = scalar_lea.vmem [#allocation8], %s250
        %s252 = smul.u32 32, %s25
        %s253 = ssub.s32 40, %s252
        %p254 = scmp.lt.s32.totalorder %s253, 32
        %s255 = scalar_select %p254, %s253, 32
        %s256 = smul.u32 128, %s255
        %s257 = smul.u32 2, %s26
        %s258 = smul.u32 32, %s26
        %s259 = smul.u32 32, %s25
        %s260 = ssub.s32 40, %s259
        %p261 = scmp.lt.s32.totalorder %s260, 32
        %s262 = scalar_select %p261, %s260, 32
        %s263 = smul.u32 128, %s262
        %p264 = scmp.eq.s32.totalorder %s26, 0
        // Predicated region
        $region45: #{feed_forward_prepared.1} parent=31 // pred_check
          %p265 = pneg %p264
        $region46: #{feed_forward_prepared.1} parent=31 // pred_check_branch
          %267 = sbr.rel (%p265) target = $region48
        $region47: #{feed_forward_prepared.1} parent=31 // pred_region
          %268 = vst [vmem:[%s251] sm:$0xff] 0.0
          %269 = vst [vmem:[%s251 + $0x8] sm:$0xff] 0.0
          %270 = vst [vmem:[%s251 + $0x10] sm:$0xff] 0.0
          %271 = vst [vmem:[%s251 + $0x18] sm:$0xff] 0.0
          %272 = vst [vmem:[%s251 + $0x20] sm:$0xff] 0.0
          %273 = vst [vmem:[%s251 + $0x28] sm:$0xff] 0.0
          %274 = vst [vmem:[%s251 + $0x30] sm:$0xff] 0.0
          %275 = vst [vmem:[%s251 + $0x38] sm:$0xff] 0.0
          %276 = vst [vmem:[%s251 + $0x40] sm:$0xff] 0.0
          %277 = vst [vmem:[%s251 + $0x48] sm:$0xff] 0.0
          %278 = vst [vmem:[%s251 + $0x50] sm:$0xff] 0.0
          %279 = vst [vmem:[%s251 + $0x58] sm:$0xff] 0.0
          %280 = vst [vmem:[%s251 + $0x60] sm:$0xff] 0.0
          %281 = vst [vmem:[%s251 + $0x68] sm:$0xff] 0.0
          %282 = vst [vmem:[%s251 + $0x70] sm:$0xff] 0.0
          %283 = vst [vmem:[%s251 + $0x78] sm:$0xff] 0.0
          %284 = vst [vmem:[%s251 + $0x80] sm:$0xff] 0.0
          %285 = vst [vmem:[%s251 + $0x88] sm:$0xff] 0.0
          %286 = vst [vmem:[%s251 + $0x90] sm:$0xff] 0.0
          %287 = vst [vmem:[%s251 + $0x98] sm:$0xff] 0.0
          %288 = vst [vmem:[%s251 + $0xa0] sm:$0xff] 0.0
          %289 = vst [vmem:[%s251 + $0xa8] sm:$0xff] 0.0
          %290 = vst [vmem:[%s251 + $0xb0] sm:$0xff] 0.0
          %291 = vst [vmem:[%s251 + $0xb8] sm:$0xff] 0.0
          %292 = vst [vmem:[%s251 + $0xc0] sm:$0xff] 0.0
          %293 = vst [vmem:[%s251 + $0xc8] sm:$0xff] 0.0
          %294 = vst [vmem:[%s251 + $0xd0] sm:$0xff] 0.0
          %295 = vst [vmem:[%s251 + $0xd8] sm:$0xff] 0.0
          %296 = vst [vmem:[%s251 + $0xe0] sm:$0xff] 0.0
          %297 = vst [vmem:[%s251 + $0xe8] sm:$0xff] 0.0
          %298 = vst [vmem:[%s251 + $0xf0] sm:$0xff] 0.0
          %299 = vst [vmem:[%s251 + $0xf8] sm:$0xff] 0.0
        $region48: #{feed_forward_prepared.1} parent=31 // pred_fallthru
          _
        %v300 = vld [vmem:[%s221] sm:$0xff]
        %v301 = vld [vmem:[%s221 + $0x8] sm:$0xff]
        %v302 = vld [vmem:[%s221 + $0x10] sm:$0xff]
        %v303 = vld [vmem:[%s221 + $0x18] sm:$0xff]
        %v304 = vld [vmem:[%s221 + $0x20] sm:$0xff]
        %v305 = vld [vmem:[%s221 + $0x28] sm:$0xff]
        %v306 = vld [vmem:[%s221 + $0x30] sm:$0xff]
        %v307 = vld [vmem:[%s221 + $0x38] sm:$0xff]
        %v308 = vld [vmem:[%s221 + $0x40] sm:$0xff]
        %v309 = vld [vmem:[%s221 + $0x48] sm:$0xff]
        %v310 = vld [vmem:[%s221 + $0x50] sm:$0xff]
        %v311 = vld [vmem:[%s221 + $0x58] sm:$0xff]
        %v312 = vld [vmem:[%s221 + $0x60] sm:$0xff]
        %v313 = vld [vmem:[%s221 + $0x68] sm:$0xff]
        %v314 = vld [vmem:[%s221 + $0x70] sm:$0xff]
        %v315 = vld [vmem:[%s221 + $0x78] sm:$0xff]
        %v316 = vld [vmem:[%s221 + $0x80] sm:$0xff]
        %v317 = vld [vmem:[%s221 + $0x88] sm:$0xff]
        %v318 = vld [vmem:[%s221 + $0x90] sm:$0xff]
        %v319 = vld [vmem:[%s221 + $0x98] sm:$0xff]
        %v320 = vld [vmem:[%s221 + $0xa0] sm:$0xff]
        %v321 = vld [vmem:[%s221 + $0xa8] sm:$0xff]
        %v322 = vld [vmem:[%s221 + $0xb0] sm:$0xff]
        %v323 = vld [vmem:[%s221 + $0xb8] sm:$0xff]
        %v324 = vld [vmem:[%s221 + $0xc0] sm:$0xff]
        %v325 = vld [vmem:[%s221 + $0xc8] sm:$0xff]
        %v326 = vld [vmem:[%s221 + $0xd0] sm:$0xff]
        %v327 = vld [vmem:[%s221 + $0xd8] sm:$0xff]
        %v328 = vld [vmem:[%s221 + $0xe0] sm:$0xff]
        %v329 = vld [vmem:[%s221 + $0xe8] sm:$0xff]
        %v330 = vld [vmem:[%s221 + $0xf0] sm:$0xff]
        %v331 = vld [vmem:[%s221 + $0xf8] sm:$0xff]
        %v332 = vld [vmem:[#allocation5] sm:$0xff]
        %v333 = vld [vmem:[#allocation5 + $0x8] sm:$0xff]
        %v334 = vld [vmem:[#allocation5 + $0x10] sm:$0xff]
        %v335 = vld [vmem:[#allocation5 + $0x18] sm:$0xff]
        %v336 = vld [vmem:[#allocation5 + $0x20] sm:$0xff]
        %v337 = vld [vmem:[#allocation5 + $0x28] sm:$0xff]
        %v338 = vld [vmem:[#allocation5 + $0x30] sm:$0xff]
        %v339 = vld [vmem:[#allocation5 + $0x38] sm:$0xff]
        %v340 = vld [vmem:[#allocation5 + $0x40] sm:$0xff]
        %v341 = vld [vmem:[#allocation5 + $0x48] sm:$0xff]
        %v342 = vld [vmem:[#allocation5 + $0x50] sm:$0xff]
        %v343 = vld [vmem:[#allocation5 + $0x58] sm:$0xff]
        %v344 = vld [vmem:[#allocation5 + $0x60] sm:$0xff]
        %v345 = vld [vmem:[#allocation5 + $0x68] sm:$0xff]
        %v346 = vld [vmem:[#allocation5 + $0x70] sm:$0xff]
        %v347 = vld [vmem:[#allocation5 + $0x78] sm:$0xff]
        %v348 = vld [vmem:[#allocation5 + $0x80] sm:$0xff]
        %v349 = vld [vmem:[#allocation5 + $0x88] sm:$0xff]
        %v350 = vld [vmem:[#allocation5 + $0x90] sm:$0xff]
        %v351 = vld [vmem:[#allocation5 + $0x98] sm:$0xff]
        %v352 = vld [vmem:[#allocation5 + $0xa0] sm:$0xff]
        %v353 = vld [vmem:[#allocation5 + $0xa8] sm:$0xff]
        %v354 = vld [vmem:[#allocation5 + $0xb0] sm:$0xff]
        %v355 = vld [vmem:[#allocation5 + $0xb8] sm:$0xff]
        %v356 = vld [vmem:[#allocation5 + $0xc0] sm:$0xff]
        %v357 = vld [vmem:[#allocation5 + $0xc8] sm:$0xff]
        %v358 = vld [vmem:[#allocation5 + $0xd0] sm:$0xff]
        %v359 = vld [vmem:[#allocation5 + $0xd8] sm:$0xff]
        %v360 = vld [vmem:[#allocation5 + $0xe0] sm:$0xff]
        %v361 = vld [vmem:[#allocation5 + $0xe8] sm:$0xff]
        %v362 = vld [vmem:[#allocation5 + $0xf0] sm:$0xff]
        %v363 = vld [vmem:[#allocation5 + $0xf8] sm:$0xff]
        %364 = vmatprep.subr.mxu0 %v363
        %365 = vmatpush1.msra.mxu0 %v362
        %366 = vmatprep.subr.mxu0 %v361
        %367 = vmatpush1.msra.mxu0 %v360
        %368 = vmatprep.subr.mxu0 %v359
        %369 = vmatpush1.msra.mxu0 %v358
        %370 = vmatprep.subr.mxu0 %v357
        %371 = vmatpush1.msra.mxu0 %v356
        %372 = vmatprep.subr.mxu0 %v355
        %373 = vmatpush1.msra.mxu0 %v354
        %374 = vmatprep.subr.mxu0 %v353
        %375 = vmatpush1.msra.mxu0 %v352
        %376 = vmatprep.subr.mxu0 %v351
        %377 = vmatpush1.msra.mxu0 %v350
        %378 = vmatprep.subr.mxu0 %v349
        %379 = vmatpush1.msra.mxu0 %v348
        %380 = vmatprep.subr.mxu0 %v347
        %381 = vmatpush1.msra.mxu0 %v346
        %382 = vmatprep.subr.mxu0 %v345
        %383 = vmatpush1.msra.mxu0 %v344
        %384 = vmatprep.subr.mxu0 %v343
        %385 = vmatpush1.msra.mxu0 %v342
        %386 = vmatprep.subr.mxu0 %v341
        %387 = vmatpush1.msra.mxu0 %v340
        %388 = vmatprep.subr.mxu0 %v339
        %389 = vmatpush1.msra.mxu0 %v338
        %390 = vmatprep.subr.mxu0 %v337
        %391 = vmatpush1.msra.mxu0 %v336
        %392 = vmatprep.subr.mxu0 %v335
        %393 = vmatpush1.msra.mxu0 %v334
        %394 = vmatprep.subr.mxu0 %v333
        %395 = vmatpush1.msra.mxu0 %v332
        %396 = vmatprep.subr.mxu0 0.0
        %397 = vmatpush2.msra.mxu0 0.0
        %398 = vmatprep.subr.mxu0 0.0
        %399 = vmatpush2.msra.mxu0 0.0
        %400 = vmatprep.subr.mxu0 0.0
        %401 = vmatpush2.msra.mxu0 0.0
        %402 = vmatprep.subr.mxu0 0.0
        %403 = vmatpush2.msra.mxu0 0.0
        %404 = vmatprep.subr.mxu0 0.0
        %405 = vmatpush2.msra.mxu0 0.0
        %406 = vmatprep.subr.mxu0 0.0
        %407 = vmatpush2.msra.mxu0 0.0
        %408 = vmatprep.subr.mxu0 0.0
        %409 = vmatpush2.msra.mxu0 0.0
        %410 = vmatprep.subr.mxu0 0.0
        %411 = vmatpush2.msra.mxu0 0.0
        %412 = vmatprep.subr.mxu0 0.0
        %413 = vmatpush2.msra.mxu0 0.0
        %414 = vmatprep.subr.mxu0 0.0
        %415 = vmatpush2.msra.mxu0 0.0
        %416 = vmatprep.subr.mxu0 0.0
        %417 = vmatpush2.msra.mxu0 0.0
        %418 = vmatprep.subr.mxu0 0.0
        %419 = vmatpush2.msra.mxu0 0.0
        %420 = vmatprep.subr.mxu0 0.0
        %421 = vmatpush2.msra.mxu0 0.0
        %422 = vmatprep.subr.mxu0 0.0
        %423 = vmatpush2.msra.mxu0 0.0
        %424 = vmatprep.subr.mxu0 0.0
        %425 = vmatpush2.msra.mxu0 0.0
        %426 = vmatprep.subr.mxu0 0.0
        %427 = vmatpush2.msra.mxu0 0.0
        %428 = vmatprep.mubr.f32.mxu0 0.0
        %429 = vmatmul.mubr.f32.gmra.mxu0 %v300
        %v430 = vpop.f32.mrf.mxu0
        %v431 = vadd.f32 0.0, %v430
        %v432 = vpop.f32.mrf.mxu0
        %v433 = vadd.f32 0.0, %v432
        %434 = vmatprep.mubr.f32.mxu0 0.0
        %435 = vmatmul.mubr.f32.gmra.mxu0 %v301
        %v436 = vpop.f32.mrf.mxu0
        %v437 = vadd.f32 0.0, %v436
        %v438 = vpop.f32.mrf.mxu0
        %v439 = vadd.f32 0.0, %v438
        %440 = vmatprep.mubr.f32.mxu0 0.0
        %441 = vmatmul.mubr.f32.gmra.mxu0 %v302
        %v442 = vpop.f32.mrf.mxu0
        %v443 = vadd.f32 0.0, %v442
        %v444 = vpop.f32.mrf.mxu0
        %v445 = vadd.f32 0.0, %v444
        %446 = vmatprep.mubr.f32.mxu0 0.0
        %447 = vmatmul.mubr.f32.gmra.mxu0 %v303
        %v448 = vpop.f32.mrf.mxu0
        %v449 = vadd.f32 0.0, %v448
        %v450 = vpop.f32.mrf.mxu0
        %v451 = vadd.f32 0.0, %v450
        %452 = vmatprep.mubr.f32.mxu0 0.0
        %453 = vmatmul.mubr.f32.gmra.mxu0 %v304
        %v454 = vpop.f32.mrf.mxu0
        %v455 = vadd.f32 0.0, %v454
        %v456 = vpop.f32.mrf.mxu0
        %v457 = vadd.f32 0.0, %v456
        %458 = vmatprep.mubr.f32.mxu0 0.0
        %459 = vmatmul.mubr.f32.gmra.mxu0 %v305
        %v460 = vpop.f32.mrf.mxu0
        %v461 = vadd.f32 0.0, %v460
        %v462 = vpop.f32.mrf.mxu0
        %v463 = vadd.f32 0.0, %v462
        %464 = vmatprep.mubr.f32.mxu0 0.0
        %465 = vmatmul.mubr.f32.gmra.mxu0 %v306
        %v466 = vpop.f32.mrf.mxu0
        %v467 = vadd.f32 0.0, %v466
        %v468 = vpop.f32.mrf.mxu0
        %v469 = vadd.f32 0.0, %v468
        %470 = vmatprep.mubr.f32.mxu0 0.0
        %471 = vmatmul.mubr.f32.gmra.mxu0 %v307
        %v472 = vpop.f32.mrf.mxu0
        %v473 = vadd.f32 0.0, %v472
        %v474 = vpop.f32.mrf.mxu0
        %v475 = vadd.f32 0.0, %v474
        %476 = vmatprep.mubr.f32.mxu0 0.0
        %477 = vmatmul.mubr.f32.gmra.mxu0 %v308
        %v478 = vpop.f32.mrf.mxu0
        %v479 = vadd.f32 0.0, %v478
        %v480 = vpop.f32.mrf.mxu0
        %v481 = vadd.f32 0.0, %v480
        %482 = vmatprep.mubr.f32.mxu0 0.0
        %483 = vmatmul.mubr.f32.gmra.mxu0 %v309
        %v484 = vpop.f32.mrf.mxu0
        %v485 = vadd.f32 0.0, %v484
        %v486 = vpop.f32.mrf.mxu0
        %v487 = vadd.f32 0.0, %v486
        %488 = vmatprep.mubr.f32.mxu0 0.0
        %489 = vmatmul.mubr.f32.gmra.mxu0 %v310
        %v490 = vpop.f32.mrf.mxu0
        %v491 = vadd.f32 0.0, %v490
        %v492 = vpop.f32.mrf.mxu0
        %v493 = vadd.f32 0.0, %v492
        %494 = vmatprep.mubr.f32.mxu0 0.0
        %495 = vmatmul.mubr.f32.gmra.mxu0 %v311
        %v496 = vpop.f32.mrf.mxu0
        %v497 = vadd.f32 0.0, %v496
        %v498 = vpop.f32.mrf.mxu0
        %v499 = vadd.f32 0.0, %v498
        %500 = vmatprep.mubr.f32.mxu0 0.0
        %501 = vmatmul.mubr.f32.gmra.mxu0 %v312
        %v502 = vpop.f32.mrf.mxu0
        %v503 = vadd.f32 0.0, %v502
        %v504 = vpop.f32.mrf.mxu0
        %v505 = vadd.f32 0.0, %v504
        %506 = vmatprep.mubr.f32.mxu0 0.0
        %507 = vmatmul.mubr.f32.gmra.mxu0 %v313
        %v508 = vpop.f32.mrf.mxu0
        %v509 = vadd.f32 0.0, %v508
        %v510 = vpop.f32.mrf.mxu0
        %v511 = vadd.f32 0.0, %v510
        %512 = vmatprep.mubr.f32.mxu0 0.0
        %513 = vmatmul.mubr.f32.gmra.mxu0 %v314
        %v514 = vpop.f32.mrf.mxu0
        %v515 = vadd.f32 0.0, %v514
        %v516 = vpop.f32.mrf.mxu0
        %v517 = vadd.f32 0.0, %v516
        %518 = vmatprep.mubr.f32.mxu0 0.0
        %519 = vmatmul.mubr.f32.gmra.mxu0 %v315
        %v520 = vpop.f32.mrf.mxu0
        %v521 = vadd.f32 0.0, %v520
        %v522 = vpop.f32.mrf.mxu0
        %v523 = vadd.f32 0.0, %v522
        %524 = vmatprep.mubr.f32.mxu0 0.0
        %525 = vmatmul.mubr.f32.gmra.mxu0 %v316
        %v526 = vpop.f32.mrf.mxu0
        %v527 = vadd.f32 0.0, %v526
        %v528 = vpop.f32.mrf.mxu0
        %v529 = vadd.f32 0.0, %v528
        %530 = vmatprep.mubr.f32.mxu0 0.0
        %531 = vmatmul.mubr.f32.gmra.mxu0 %v317
        %v532 = vpop.f32.mrf.mxu0
        %v533 = vadd.f32 0.0, %v532
        %v534 = vpop.f32.mrf.mxu0
        %v535 = vadd.f32 0.0, %v534
        %536 = vmatprep.mubr.f32.mxu0 0.0
        %537 = vmatmul.mubr.f32.gmra.mxu0 %v318
        %v538 = vpop.f32.mrf.mxu0
        %v539 = vadd.f32 0.0, %v538
        %v540 = vpop.f32.mrf.mxu0
        %v541 = vadd.f32 0.0, %v540
        %542 = vmatprep.mubr.f32.mxu0 0.0
        %543 = vmatmul.mubr.f32.gmra.mxu0 %v319
        %v544 = vpop.f32.mrf.mxu0
        %v545 = vadd.f32 0.0, %v544
        %v546 = vpop.f32.mrf.mxu0
        %v547 = vadd.f32 0.0, %v546
        %548 = vmatprep.mubr.f32.mxu0 0.0
        %549 = vmatmul.mubr.f32.gmra.mxu0 %v320
        %v550 = vpop.f32.mrf.mxu0
        %v551 = vadd.f32 0.0, %v550
        %v552 = vpop.f32.mrf.mxu0
        %v553 = vadd.f32 0.0, %v552
        %554 = vmatprep.mubr.f32.mxu0 0.0
        %555 = vmatmul.mubr.f32.gmra.mxu0 %v321
        %v556 = vpop.f32.mrf.mxu0
        %v557 = vadd.f32 0.0, %v556
        %v558 = vpop.f32.mrf.mxu0
        %v559 = vadd.f32 0.0, %v558
        %560 = vmatprep.mubr.f32.mxu0 0.0
        %561 = vmatmul.mubr.f32.gmra.mxu0 %v322
        %v562 = vpop.f32.mrf.mxu0
        %v563 = vadd.f32 0.0, %v562
        %v564 = vpop.f32.mrf.mxu0
        %v565 = vadd.f32 0.0, %v564
        %566 = vmatprep.mubr.f32.mxu0 0.0
        %567 = vmatmul.mubr.f32.gmra.mxu0 %v323
        %v568 = vpop.f32.mrf.mxu0
        %v569 = vadd.f32 0.0, %v568
        %v570 = vpop.f32.mrf.mxu0
        %v571 = vadd.f32 0.0, %v570
        %572 = vmatprep.mubr.f32.mxu0 0.0
        %573 = vmatmul.mubr.f32.gmra.mxu0 %v324
        %v574 = vpop.f32.mrf.mxu0
        %v575 = vadd.f32 0.0, %v574
        %v576 = vpop.f32.mrf.mxu0
        %v577 = vadd.f32 0.0, %v576
        %578 = vmatprep.mubr.f32.mxu0 0.0
        %579 = vmatmul.mubr.f32.gmra.mxu0 %v325
        %v580 = vpop.f32.mrf.mxu0
        %v581 = vadd.f32 0.0, %v580
        %v582 = vpop.f32.mrf.mxu0
        %v583 = vadd.f32 0.0, %v582
        %584 = vmatprep.mubr.f32.mxu0 0.0
        %585 = vmatmul.mubr.f32.gmra.mxu0 %v326
        %v586 = vpop.f32.mrf.mxu0
        %v587 = vadd.f32 0.0, %v586
        %v588 = vpop.f32.mrf.mxu0
        %v589 = vadd.f32 0.0, %v588
        %590 = vmatprep.mubr.f32.mxu0 0.0
        %591 = vmatmul.mubr.f32.gmra.mxu0 %v327
        %v592 = vpop.f32.mrf.mxu0
        %v593 = vadd.f32 0.0, %v592
        %v594 = vpop.f32.mrf.mxu0
        %v595 = vadd.f32 0.0, %v594
        %596 = vmatprep.mubr.f32.mxu0 0.0
        %597 = vmatmul.mubr.f32.gmra.mxu0 %v328
        %v598 = vpop.f32.mrf.mxu0
        %v599 = vadd.f32 0.0, %v598
        %v600 = vpop.f32.mrf.mxu0
        %v601 = vadd.f32 0.0, %v600
        %602 = vmatprep.mubr.f32.mxu0 0.0
        %603 = vmatmul.mubr.f32.gmra.mxu0 %v329
        %v604 = vpop.f32.mrf.mxu0
        %v605 = vadd.f32 0.0, %v604
        %v606 = vpop.f32.mrf.mxu0
        %v607 = vadd.f32 0.0, %v606
        %608 = vmatprep.mubr.f32.mxu0 0.0
        %609 = vmatmul.mubr.f32.gmra.mxu0 %v330
        %v610 = vpop.f32.mrf.mxu0
        %v611 = vadd.f32 0.0, %v610
        %v612 = vpop.f32.mrf.mxu0
        %v613 = vadd.f32 0.0, %v612
        %614 = vmatprep.mubr.f32.mxu0 0.0
        %615 = vmatmul.mubr.f32.gmra.mxu0 %v331
        %v616 = vpop.f32.mrf.mxu0
        %v617 = vadd.f32 0.0, %v616
        %v618 = vpop.f32.mrf.mxu0
        %v619 = vadd.f32 0.0, %v618
        %620 = vdwg.mxu0
        %s621 = scalar_lea.vmem [#allocation5], 256
        %v622 = vld [vmem:[%s621] sm:$0xff]
        %v623 = vld [vmem:[%s621 + $0x8] sm:$0xff]
        %v624 = vld [vmem:[%s621 + $0x10] sm:$0xff]
        %v625 = vld [vmem:[%s621 + $0x18] sm:$0xff]
        %v626 = vld [vmem:[%s621 + $0x20] sm:$0xff]
        %v627 = vld [vmem:[%s621 + $0x28] sm:$0xff]
        %v628 = vld [vmem:[%s621 + $0x30] sm:$0xff]
        %v629 = vld [vmem:[%s621 + $0x38] sm:$0xff]
        %v630 = vld [vmem:[%s621 + $0x40] sm:$0xff]
        %v631 = vld [vmem:[%s621 + $0x48] sm:$0xff]
        %v632 = vld [vmem:[%s621 + $0x50] sm:$0xff]
        %v633 = vld [vmem:[%s621 + $0x58] sm:$0xff]
        %v634 = vld [vmem:[%s621 + $0x60] sm:$0xff]
        %v635 = vld [vmem:[%s621 + $0x68] sm:$0xff]
        %v636 = vld [vmem:[%s621 + $0x70] sm:$0xff]
        %v637 = vld [vmem:[%s621 + $0x78] sm:$0xff]
        %v638 = vld [vmem:[%s621 + $0x80] sm:$0xff]
        %v639 = vld [vmem:[%s621 + $0x88] sm:$0xff]
        %v640 = vld [vmem:[%s621 + $0x90] sm:$0xff]
        %v641 = vld [vmem:[%s621 + $0x98] sm:$0xff]
        %v642 = vld [vmem:[%s621 + $0xa0] sm:$0xff]
        %v643 = vld [vmem:[%s621 + $0xa8] sm:$0xff]
        %v644 = vld [vmem:[%s621 + $0xb0] sm:$0xff]
        %v645 = vld [vmem:[%s621 + $0xb8] sm:$0xff]
        %v646 = vld [vmem:[%s621 + $0xc0] sm:$0xff]
        %v647 = vld [vmem:[%s621 + $0xc8] sm:$0xff]
        %v648 = vld [vmem:[%s621 + $0xd0] sm:$0xff]
        %v649 = vld [vmem:[%s621 + $0xd8] sm:$0xff]
        %v650 = vld [vmem:[%s621 + $0xe0] sm:$0xff]
        %v651 = vld [vmem:[%s621 + $0xe8] sm:$0xff]
        %v652 = vld [vmem:[%s621 + $0xf0] sm:$0xff]
        %v653 = vld [vmem:[%s621 + $0xf8] sm:$0xff]
        %654 = vmatprep.subr.mxu0 %v653
        %655 = vmatpush1.msra.mxu0 %v652
        %656 = vmatprep.subr.mxu0 %v651
        %657 = vmatpush1.msra.mxu0 %v650
        %658 = vmatprep.subr.mxu0 %v649
        %659 = vmatpush1.msra.mxu0 %v648
        %660 = vmatprep.subr.mxu0 %v647
        %661 = vmatpush1.msra.mxu0 %v646
        %662 = vmatprep.subr.mxu0 %v645
        %663 = vmatpush1.msra.mxu0 %v644
        %664 = vmatprep.subr.mxu0 %v643
        %665 = vmatpush1.msra.mxu0 %v642
        %666 = vmatprep.subr.mxu0 %v641
        %667 = vmatpush1.msra.mxu0 %v640
        %668 = vmatprep.subr.mxu0 %v639
        %669 = vmatpush1.msra.mxu0 %v638
        %670 = vmatprep.subr.mxu0 %v637
        %671 = vmatpush1.msra.mxu0 %v636
        %672 = vmatprep.subr.mxu0 %v635
        %673 = vmatpush1.msra.mxu0 %v634
        %674 = vmatprep.subr.mxu0 %v633
        %675 = vmatpush1.msra.mxu0 %v632
        %676 = vmatprep.subr.mxu0 %v631
        %677 = vmatpush1.msra.mxu0 %v630
        %678 = vmatprep.subr.mxu0 %v629
        %679 = vmatpush1.msra.mxu0 %v628
        %680 = vmatprep.subr.mxu0 %v627
        %681 = vmatpush1.msra.mxu0 %v626
        %682 = vmatprep.subr.mxu0 %v625
        %683 = vmatpush1.msra.mxu0 %v624
        %684 = vmatprep.subr.mxu0 %v623
        %685 = vmatpush1.msra.mxu0 %v622
        %686 = vmatprep.subr.mxu0 0.0
        %687 = vmatpush2.msra.mxu0 0.0
        %688 = vmatprep.subr.mxu0 0.0
        %689 = vmatpush2.msra.mxu0 0.0
        %690 = vmatprep.subr.mxu0 0.0
        %691 = vmatpush2.msra.mxu0 0.0
        %692 = vmatprep.subr.mxu0 0.0
        %693 = vmatpush2.msra.mxu0 0.0
        %694 = vmatprep.subr.mxu0 0.0
        %695 = vmatpush2.msra.mxu0 0.0
        %696 = vmatprep.subr.mxu0 0.0
        %697 = vmatpush2.msra.mxu0 0.0
        %698 = vmatprep.subr.mxu0 0.0
        %699 = vmatpush2.msra.mxu0 0.0
        %700 = vmatprep.subr.mxu0 0.0
        %701 = vmatpush2.msra.mxu0 0.0
        %702 = vmatprep.subr.mxu0 0.0
        %703 = vmatpush2.msra.mxu0 0.0
        %704 = vmatprep.subr.mxu0 0.0
        %705 = vmatpush2.msra.mxu0 0.0
        %706 = vmatprep.subr.mxu0 0.0
        %707 = vmatpush2.msra.mxu0 0.0
        %708 = vmatprep.subr.mxu0 0.0
        %709 = vmatpush2.msra.mxu0 0.0
        %710 = vmatprep.subr.mxu0 0.0
        %711 = vmatpush2.msra.mxu0 0.0
        %712 = vmatprep.subr.mxu0 0.0
        %713 = vmatpush2.msra.mxu0 0.0
        %714 = vmatprep.subr.mxu0 0.0
        %715 = vmatpush2.msra.mxu0 0.0
        %716 = vmatprep.subr.mxu0 0.0
        %717 = vmatpush2.msra.mxu0 0.0
        %718 = vmatprep.mubr.f32.mxu0 0.0
        %719 = vmatmul.mubr.f32.gmra.mxu0 %v300
        %v720 = vpop.f32.mrf.mxu0
        %v721 = vadd.f32 0.0, %v720
        %v722 = vpop.f32.mrf.mxu0
        %v723 = vadd.f32 0.0, %v722
        %724 = vmatprep.mubr.f32.mxu0 0.0
        %725 = vmatmul.mubr.f32.gmra.mxu0 %v301
        %v726 = vpop.f32.mrf.mxu0
        %v727 = vadd.f32 0.0, %v726
        %v728 = vpop.f32.mrf.mxu0
        %v729 = vadd.f32 0.0, %v728
        %730 = vmatprep.mubr.f32.mxu0 0.0
        %731 = vmatmul.mubr.f32.gmra.mxu0 %v302
        %v732 = vpop.f32.mrf.mxu0
        %v733 = vadd.f32 0.0, %v732
        %v734 = vpop.f32.mrf.mxu0
        %v735 = vadd.f32 0.0, %v734
        %736 = vmatprep.mubr.f32.mxu0 0.0
        %737 = vmatmul.mubr.f32.gmra.mxu0 %v303
        %v738 = vpop.f32.mrf.mxu0
        %v739 = vadd.f32 0.0, %v738
        %v740 = vpop.f32.mrf.mxu0
        %v741 = vadd.f32 0.0, %v740
        %742 = vmatprep.mubr.f32.mxu0 0.0
        %743 = vmatmul.mubr.f32.gmra.mxu0 %v304
        %v744 = vpop.f32.mrf.mxu0
        %v745 = vadd.f32 0.0, %v744
        %v746 = vpop.f32.mrf.mxu0
        %v747 = vadd.f32 0.0, %v746
        %748 = vmatprep.mubr.f32.mxu0 0.0
        %749 = vmatmul.mubr.f32.gmra.mxu0 %v305
        %v750 = vpop.f32.mrf.mxu0
        %v751 = vadd.f32 0.0, %v750
        %v752 = vpop.f32.mrf.mxu0
        %v753 = vadd.f32 0.0, %v752
        %754 = vmatprep.mubr.f32.mxu0 0.0
        %755 = vmatmul.mubr.f32.gmra.mxu0 %v306
        %v756 = vpop.f32.mrf.mxu0
        %v757 = vadd.f32 0.0, %v756
        %v758 = vpop.f32.mrf.mxu0
        %v759 = vadd.f32 0.0, %v758
        %760 = vmatprep.mubr.f32.mxu0 0.0
        %761 = vmatmul.mubr.f32.gmra.mxu0 %v307
        %v762 = vpop.f32.mrf.mxu0
        %v763 = vadd.f32 0.0, %v762
        %v764 = vpop.f32.mrf.mxu0
        %v765 = vadd.f32 0.0, %v764
        %766 = vmatprep.mubr.f32.mxu0 0.0
        %767 = vmatmul.mubr.f32.gmra.mxu0 %v308
        %v768 = vpop.f32.mrf.mxu0
        %v769 = vadd.f32 0.0, %v768
        %v770 = vpop.f32.mrf.mxu0
        %v771 = vadd.f32 0.0, %v770
        %772 = vmatprep.mubr.f32.mxu0 0.0
        %773 = vmatmul.mubr.f32.gmra.mxu0 %v309
        %v774 = vpop.f32.mrf.mxu0
        %v775 = vadd.f32 0.0, %v774
        %v776 = vpop.f32.mrf.mxu0
        %v777 = vadd.f32 0.0, %v776
        %778 = vmatprep.mubr.f32.mxu0 0.0
        %779 = vmatmul.mubr.f32.gmra.mxu0 %v310
        %v780 = vpop.f32.mrf.mxu0
        %v781 = vadd.f32 0.0, %v780
        %v782 = vpop.f32.mrf.mxu0
        %v783 = vadd.f32 0.0, %v782
        %784 = vmatprep.mubr.f32.mxu0 0.0
        %785 = vmatmul.mubr.f32.gmra.mxu0 %v311
        %v786 = vpop.f32.mrf.mxu0
        %v787 = vadd.f32 0.0, %v786
        %v788 = vpop.f32.mrf.mxu0
        %v789 = vadd.f32 0.0, %v788
        %790 = vmatprep.mubr.f32.mxu0 0.0
        %791 = vmatmul.mubr.f32.gmra.mxu0 %v312
        %v792 = vpop.f32.mrf.mxu0
        %v793 = vadd.f32 0.0, %v792
        %v794 = vpop.f32.mrf.mxu0
        %v795 = vadd.f32 0.0, %v794
        %796 = vmatprep.mubr.f32.mxu0 0.0
        %797 = vmatmul.mubr.f32.gmra.mxu0 %v313
        %v798 = vpop.f32.mrf.mxu0
        %v799 = vadd.f32 0.0, %v798
        %v800 = vpop.f32.mrf.mxu0
        %v801 = vadd.f32 0.0, %v800
        %802 = vmatprep.mubr.f32.mxu0 0.0
        %803 = vmatmul.mubr.f32.gmra.mxu0 %v314
        %v804 = vpop.f32.mrf.mxu0
        %v805 = vadd.f32 0.0, %v804
        %v806 = vpop.f32.mrf.mxu0
        %v807 = vadd.f32 0.0, %v806
        %808 = vmatprep.mubr.f32.mxu0 0.0
        %809 = vmatmul.mubr.f32.gmra.mxu0 %v315
        %v810 = vpop.f32.mrf.mxu0
        %v811 = vadd.f32 0.0, %v810
        %v812 = vpop.f32.mrf.mxu0
        %v813 = vadd.f32 0.0, %v812
        %814 = vmatprep.mubr.f32.mxu0 0.0
        %815 = vmatmul.mubr.f32.gmra.mxu0 %v316
        %v816 = vpop.f32.mrf.mxu0
        %v817 = vadd.f32 0.0, %v816
        %v818 = vpop.f32.mrf.mxu0
        %v819 = vadd.f32 0.0, %v818
        %820 = vmatprep.mubr.f32.mxu0 0.0
        %821 = vmatmul.mubr.f32.gmra.mxu0 %v317
        %v822 = vpop.f32.mrf.mxu0
        %v823 = vadd.f32 0.0, %v822
        %v824 = vpop.f32.mrf.mxu0
        %v825 = vadd.f32 0.0, %v824
        %826 = vmatprep.mubr.f32.mxu0 0.0
        %827 = vmatmul.mubr.f32.gmra.mxu0 %v318
        %v828 = vpop.f32.mrf.mxu0
        %v829 = vadd.f32 0.0, %v828
        %v830 = vpop.f32.mrf.mxu0
        %v831 = vadd.f32 0.0, %v830
        %832 = vmatprep.mubr.f32.mxu0 0.0
        %833 = vmatmul.mubr.f32.gmra.mxu0 %v319
        %v834 = vpop.f32.mrf.mxu0
        %v835 = vadd.f32 0.0, %v834
        %v836 = vpop.f32.mrf.mxu0
        %v837 = vadd.f32 0.0, %v836
        %838 = vmatprep.mubr.f32.mxu0 0.0
        %839 = vmatmul.mubr.f32.gmra.mxu0 %v320
        %v840 = vpop.f32.mrf.mxu0
        %v841 = vadd.f32 0.0, %v840
        %v842 = vpop.f32.mrf.mxu0
        %v843 = vadd.f32 0.0, %v842
        %844 = vmatprep.mubr.f32.mxu0 0.0
        %845 = vmatmul.mubr.f32.gmra.mxu0 %v321
        %v846 = vpop.f32.mrf.mxu0
        %v847 = vadd.f32 0.0, %v846
        %v848 = vpop.f32.mrf.mxu0
        %v849 = vadd.f32 0.0, %v848
        %850 = vmatprep.mubr.f32.mxu0 0.0
        %851 = vmatmul.mubr.f32.gmra.mxu0 %v322
        %v852 = vpop.f32.mrf.mxu0
        %v853 = vadd.f32 0.0, %v852
        %v854 = vpop.f32.mrf.mxu0
        %v855 = vadd.f32 0.0, %v854
        %856 = vmatprep.mubr.f32.mxu0 0.0
        %857 = vmatmul.mubr.f32.gmra.mxu0 %v323
        %v858 = vpop.f32.mrf.mxu0
        %v859 = vadd.f32 0.0, %v858
        %v860 = vpop.f32.mrf.mxu0
        %v861 = vadd.f32 0.0, %v860
        %862 = vmatprep.mubr.f32.mxu0 0.0
        %863 = vmatmul.mubr.f32.gmra.mxu0 %v324
        %v864 = vpop.f32.mrf.mxu0
        %v865 = vadd.f32 0.0, %v864
        %v866 = vpop.f32.mrf.mxu0
        %v867 = vadd.f32 0.0, %v866
        %868 = vmatprep.mubr.f32.mxu0 0.0
        %869 = vmatmul.mubr.f32.gmra.mxu0 %v325
        %v870 = vpop.f32.mrf.mxu0
        %v871 = vadd.f32 0.0, %v870
        %v872 = vpop.f32.mrf.mxu0
        %v873 = vadd.f32 0.0, %v872
        %874 = vmatprep.mubr.f32.mxu0 0.0
        %875 = vmatmul.mubr.f32.gmra.mxu0 %v326
        %v876 = vpop.f32.mrf.mxu0
        %v877 = vadd.f32 0.0, %v876
        %v878 = vpop.f32.mrf.mxu0
        %v879 = vadd.f32 0.0, %v878
        %880 = vmatprep.mubr.f32.mxu0 0.0
        %881 = vmatmul.mubr.f32.gmra.mxu0 %v327
        %v882 = vpop.f32.mrf.mxu0
        %v883 = vadd.f32 0.0, %v882
        %v884 = vpop.f32.mrf.mxu0
        %v885 = vadd.f32 0.0, %v884
        %886 = vmatprep.mubr.f32.mxu0 0.0
        %887 = vmatmul.mubr.f32.gmra.mxu0 %v328
        %v888 = vpop.f32.mrf.mxu0
        %v889 = vadd.f32 0.0, %v888
        %v890 = vpop.f32.mrf.mxu0
        %v891 = vadd.f32 0.0, %v890
        %892 = vmatprep.mubr.f32.mxu0 0.0
        %893 = vmatmul.mubr.f32.gmra.mxu0 %v329
        %v894 = vpop.f32.mrf.mxu0
        %v895 = vadd.f32 0.0, %v894
        %v896 = vpop.f32.mrf.mxu0
        %v897 = vadd.f32 0.0, %v896
        %898 = vmatprep.mubr.f32.mxu0 0.0
        %899 = vmatmul.mubr.f32.gmra.mxu0 %v330
        %v900 = vpop.f32.mrf.mxu0
        %v901 = vadd.f32 0.0, %v900
        %v902 = vpop.f32.mrf.mxu0
        %v903 = vadd.f32 0.0, %v902
        %904 = vmatprep.mubr.f32.mxu0 0.0
        %905 = vmatmul.mubr.f32.gmra.mxu0 %v331
        %v906 = vpop.f32.mrf.mxu0
        %v907 = vadd.f32 0.0, %v906
        %v908 = vpop.f32.mrf.mxu0
        %v909 = vadd.f32 0.0, %v908
        %910 = vdwg.mxu0
        %v911 = vxor.u32 %v431, 2147483648
        %v912 = vxor.u32 %v433, 2147483648
        %v913 = vxor.u32 %v437, 2147483648
        %v914 = vxor.u32 %v439, 2147483648
        %v915 = vxor.u32 %v443, 2147483648
        %v916 = vxor.u32 %v445, 2147483648
        %v917 = vxor.u32 %v449, 2147483648
        %v918 = vxor.u32 %v451, 2147483648
        %v919 = vxor.u32 %v455, 2147483648
        %v920 = vxor.u32 %v457, 2147483648
        %v921 = vxor.u32 %v461, 2147483648
        %v922 = vxor.u32 %v463, 2147483648
        %v923 = vxor.u32 %v467, 2147483648
        %v924 = vxor.u32 %v469, 2147483648
        %v925 = vxor.u32 %v473, 2147483648
        %v926 = vxor.u32 %v475, 2147483648
        %v927 = vxor.u32 %v479, 2147483648
        %v928 = vxor.u32 %v481, 2147483648
        %v929 = vxor.u32 %v485, 2147483648
        %v930 = vxor.u32 %v487, 2147483648
        %v931 = vxor.u32 %v491, 2147483648
        %v932 = vxor.u32 %v493, 2147483648
        %v933 = vxor.u32 %v497, 2147483648
        %v934 = vxor.u32 %v499, 2147483648
        %v935 = vxor.u32 %v503, 2147483648
        %v936 = vxor.u32 %v505, 2147483648
        %v937 = vxor.u32 %v509, 2147483648
        %v938 = vxor.u32 %v511, 2147483648
        %v939 = vxor.u32 %v515, 2147483648
        %v940 = vxor.u32 %v517, 2147483648
        %v941 = vxor.u32 %v521, 2147483648
        %v942 = vxor.u32 %v523, 2147483648
        %v943 = vxor.u32 %v527, 2147483648
        %v944 = vxor.u32 %v529, 2147483648
        %v945 = vxor.u32 %v533, 2147483648
        %v946 = vxor.u32 %v535, 2147483648
        %v947 = vxor.u32 %v539, 2147483648
        %v948 = vxor.u32 %v541, 2147483648
        %v949 = vxor.u32 %v545, 2147483648
        %v950 = vxor.u32 %v547, 2147483648
        %v951 = vxor.u32 %v551, 2147483648
        %v952 = vxor.u32 %v553, 2147483648
        %v953 = vxor.u32 %v557, 2147483648
        %v954 = vxor.u32 %v559, 2147483648
        %v955 = vxor.u32 %v563, 2147483648
        %v956 = vxor.u32 %v565, 2147483648
        %v957 = vxor.u32 %v569, 2147483648
        %v958 = vxor.u32 %v571, 2147483648
        %v959 = vxor.u32 %v575, 2147483648
        %v960 = vxor.u32 %v577, 2147483648
        %v961 = vxor.u32 %v581, 2147483648
        %v962 = vxor.u32 %v583, 2147483648
        %v963 = vxor.u32 %v587, 2147483648
        %v964 = vxor.u32 %v589, 2147483648
        %v965 = vxor.u32 %v593, 2147483648
        %v966 = vxor.u32 %v595, 2147483648
        %v967 = vxor.u32 %v599, 2147483648
        %v968 = vxor.u32 %v601, 2147483648
        %v969 = vxor.u32 %v605, 2147483648
        %v970 = vxor.u32 %v607, 2147483648
        %v971 = vxor.u32 %v611, 2147483648
        %v972 = vxor.u32 %v613, 2147483648
        %v973 = vxor.u32 %v617, 2147483648
        %v974 = vxor.u32 %v619, 2147483648
        %v975 = vmul.f32 %v911, 1.442695
        %v976 = vpow.pop %v975
        %v977 = vmul.f32 %v912, 1.442695
        %v978 = vpow.pop %v977
        %v979 = vmul.f32 %v913, 1.442695
        %v980 = vpow.pop %v979
        %v981 = vmul.f32 %v914, 1.442695
        %v982 = vpow.pop %v981
        %v983 = vmul.f32 %v915, 1.442695
        %v984 = vpow.pop %v983
        %v985 = vmul.f32 %v916, 1.442695
        %v986 = vpow.pop %v985
        %v987 = vmul.f32 %v917, 1.442695
        %v988 = vpow.pop %v987
        %v989 = vmul.f32 %v918, 1.442695
        %v990 = vpow.pop %v989
        %v991 = vmul.f32 %v919, 1.442695
        %v992 = vpow.pop %v991
        %v993 = vmul.f32 %v920, 1.442695
        %v994 = vpow.pop %v993
        %v995 = vmul.f32 %v921, 1.442695
        %v996 = vpow.pop %v995
        %v997 = vmul.f32 %v922, 1.442695
        %v998 = vpow.pop %v997
        %v999 = vmul.f32 %v923, 1.442695
        %v1000 = vpow.pop %v999
        %v1001 = vmul.f32 %v924, 1.442695
        %v1002 = vpow.pop %v1001
        %v1003 = vmul.f32 %v925, 1.442695
        %v1004 = vpow.pop %v1003
        %v1005 = vmul.f32 %v926, 1.442695
        %v1006 = vpow.pop %v1005
        %v1007 = vmul.f32 %v927, 1.442695
        %v1008 = vpow.pop %v1007
        %v1009 = vmul.f32 %v928, 1.442695
        %v1010 = vpow.pop %v1009
        %v1011 = vmul.f32 %v929, 1.442695
        %v1012 = vpow.pop %v1011
        %v1013 = vmul.f32 %v930, 1.442695
        %v1014 = vpow.pop %v1013
        %v1015 = vmul.f32 %v931, 1.442695
        %v1016 = vpow.pop %v1015
        %v1017 = vmul.f32 %v932, 1.442695
        %v1018 = vpow.pop %v1017
        %v1019 = vmul.f32 %v933, 1.442695
        %v1020 = vpow.pop %v1019
        %v1021 = vmul.f32 %v934, 1.442695
        %v1022 = vpow.pop %v1021
        %v1023 = vmul.f32 %v935, 1.442695
        %v1024 = vpow.pop %v1023
        %v1025 = vmul.f32 %v936, 1.442695
        %v1026 = vpow.pop %v1025
        %v1027 = vmul.f32 %v937, 1.442695
        %v1028 = vpow.pop %v1027
        %v1029 = vmul.f32 %v938, 1.442695
        %v1030 = vpow.pop %v1029
        %v1031 = vmul.f32 %v939, 1.442695
        %v1032 = vpow.pop %v1031
        %v1033 = vmul.f32 %v940, 1.442695
        %v1034 = vpow.pop %v1033
        %v1035 = vmul.f32 %v941, 1.442695
        %v1036 = vpow.pop %v1035
        %v1037 = vmul.f32 %v942, 1.442695
        %v1038 = vpow.pop %v1037
        %v1039 = vmul.f32 %v943, 1.442695
        %v1040 = vpow.pop %v1039
        %v1041 = vmul.f32 %v944, 1.442695
        %v1042 = vpow.pop %v1041
        %v1043 = vmul.f32 %v945, 1.442695
        %v1044 = vpow.pop %v1043
        %v1045 = vmul.f32 %v946, 1.442695
        %v1046 = vpow.pop %v1045
        %v1047 = vmul.f32 %v947, 1.442695
        %v1048 = vpow.pop %v1047
        %v1049 = vmul.f32 %v948, 1.442695
        %v1050 = vpow.pop %v1049
        %v1051 = vmul.f32 %v949, 1.442695
        %v1052 = vpow.pop %v1051
        %v1053 = vmul.f32 %v950, 1.442695
        %v1054 = vpow.pop %v1053
        %v1055 = vmul.f32 %v951, 1.442695
        %v1056 = vpow.pop %v1055
        %v1057 = vmul.f32 %v952, 1.442695
        %v1058 = vpow.pop %v1057
        %v1059 = vmul.f32 %v953, 1.442695
        %v1060 = vpow.pop %v1059
        %v1061 = vmul.f32 %v954, 1.442695
        %v1062 = vpow.pop %v1061
        %v1063 = vmul.f32 %v955, 1.442695
        %v1064 = vpow.pop %v1063
        %v1065 = vmul.f32 %v956, 1.442695
        %v1066 = vpow.pop %v1065
        %v1067 = vmul.f32 %v957, 1.442695
        %v1068 = vpow.pop %v1067
        %v1069 = vmul.f32 %v958, 1.442695
        %v1070 = vpow.pop %v1069
        %v1071 = vmul.f32 %v959, 1.442695
        %v1072 = vpow.pop %v1071
        %v1073 = vmul.f32 %v960, 1.442695
        %v1074 = vpow.pop %v1073
        %v1075 = vmul.f32 %v961, 1.442695
        %v1076 = vpow.pop %v1075
        %v1077 = vmul.f32 %v962, 1.442695
        %v1078 = vpow.pop %v1077
        %v1079 = vmul.f32 %v963, 1.442695
        %v1080 = vpow.pop %v1079
        %v1081 = vmul.f32 %v964, 1.442695
        %v1082 = vpow.pop %v1081
        %v1083 = vmul.f32 %v965, 1.442695
        %v1084 = vpow.pop %v1083
        %v1085 = vmul.f32 %v966, 1.442695
        %v1086 = vpow.pop %v1085
        %v1087 = vmul.f32 %v967, 1.442695
        %v1088 = vpow.pop %v1087
        %v1089 = vmul.f32 %v968, 1.442695
        %v1090 = vpow.pop %v1089
        %v1091 = vmul.f32 %v969, 1.442695
        %v1092 = vpow.pop %v1091
        %v1093 = vmul.f32 %v970, 1.442695
        %v1094 = vpow.pop %v1093
        %v1095 = vmul.f32 %v971, 1.442695
        %v1096 = vpow.pop %v1095
        %v1097 = vmul.f32 %v972, 1.442695
        %v1098 = vpow.pop %v1097
        %v1099 = vmul.f32 %v973, 1.442695
        %v1100 = vpow.pop %v1099
        %v1101 = vmul.f32 %v974, 1.442695
        %v1102 = vpow.pop %v1101
        %v1103 = vadd.f32 %v976, 1.0
        %v1104 = vadd.f32 %v978, 1.0
        %v1105 = vadd.f32 %v980, 1.0
        %v1106 = vadd.f32 %v982, 1.0
        %v1107 = vadd.f32 %v984, 1.0
        %v1108 = vadd.f32 %v986, 1.0
        %v1109 = vadd.f32 %v988, 1.0
        %v1110 = vadd.f32 %v990, 1.0
        %v1111 = vadd.f32 %v992, 1.0
        %v1112 = vadd.f32 %v994, 1.0
        %v1113 = vadd.f32 %v996, 1.0
        %v1114 = vadd.f32 %v998, 1.0
        %v1115 = vadd.f32 %v1000, 1.0
        %v1116 = vadd.f32 %v1002, 1.0
        %v1117 = vadd.f32 %v1004, 1.0
        %v1118 = vadd.f32 %v1006, 1.0
        %v1119 = vadd.f32 %v1008, 1.0
        %v1120 = vadd.f32 %v1010, 1.0
        %v1121 = vadd.f32 %v1012, 1.0
        %v1122 = vadd.f32 %v1014, 1.0
        %v1123 = vadd.f32 %v1016, 1.0
        %v1124 = vadd.f32 %v1018, 1.0
        %v1125 = vadd.f32 %v1020, 1.0
        %v1126 = vadd.f32 %v1022, 1.0
        %v1127 = vadd.f32 %v1024, 1.0
        %v1128 = vadd.f32 %v1026, 1.0
        %v1129 = vadd.f32 %v1028, 1.0
        %v1130 = vadd.f32 %v1030, 1.0
        %v1131 = vadd.f32 %v1032, 1.0
        %v1132 = vadd.f32 %v1034, 1.0
        %v1133 = vadd.f32 %v1036, 1.0
        %v1134 = vadd.f32 %v1038, 1.0
        %v1135 = vadd.f32 %v1040, 1.0
        %v1136 = vadd.f32 %v1042, 1.0
        %v1137 = vadd.f32 %v1044, 1.0
        %v1138 = vadd.f32 %v1046, 1.0
        %v1139 = vadd.f32 %v1048, 1.0
        %v1140 = vadd.f32 %v1050, 1.0
        %v1141 = vadd.f32 %v1052, 1.0
        %v1142 = vadd.f32 %v1054, 1.0
        %v1143 = vadd.f32 %v1056, 1.0
        %v1144 = vadd.f32 %v1058, 1.0
        %v1145 = vadd.f32 %v1060, 1.0
        %v1146 = vadd.f32 %v1062, 1.0
        %v1147 = vadd.f32 %v1064, 1.0
        %v1148 = vadd.f32 %v1066, 1.0
        %v1149 = vadd.f32 %v1068, 1.0
        %v1150 = vadd.f32 %v1070, 1.0
        %v1151 = vadd.f32 %v1072, 1.0
        %v1152 = vadd.f32 %v1074, 1.0
        %v1153 = vadd.f32 %v1076, 1.0
        %v1154 = vadd.f32 %v1078, 1.0
        %v1155 = vadd.f32 %v1080, 1.0
        %v1156 = vadd.f32 %v1082, 1.0
        %v1157 = vadd.f32 %v1084, 1.0
        %v1158 = vadd.f32 %v1086, 1.0
        %v1159 = vadd.f32 %v1088, 1.0
        %v1160 = vadd.f32 %v1090, 1.0
        %v1161 = vadd.f32 %v1092, 1.0
        %v1162 = vadd.f32 %v1094, 1.0
        %v1163 = vadd.f32 %v1096, 1.0
        %v1164 = vadd.f32 %v1098, 1.0
        %v1165 = vadd.f32 %v1100, 1.0
        %v1166 = vadd.f32 %v1102, 1.0
        %v1167 = vrcp.pop %v1103
        %v1168 = vmul.f32 1.0, %v1167
        %v1169 = vrcp.pop %v1104
        %v1170 = vmul.f32 1.0, %v1169
        %v1171 = vrcp.pop %v1105
        %v1172 = vmul.f32 1.0, %v1171
        %v1173 = vrcp.pop %v1106
        %v1174 = vmul.f32 1.0, %v1173
        %v1175 = vrcp.pop %v1107
        %v1176 = vmul.f32 1.0, %v1175
        %v1177 = vrcp.pop %v1108
        %v1178 = vmul.f32 1.0, %v1177
        %v1179 = vrcp.pop %v1109
        %v1180 = vmul.f32 1.0, %v1179
        %v1181 = vrcp.pop %v1110
        %v1182 = vmul.f32 1.0, %v1181
        %v1183 = vrcp.pop %v1111
        %v1184 = vmul.f32 1.0, %v1183
        %v1185 = vrcp.pop %v1112
        %v1186 = vmul.f32 1.0, %v1185
        %v1187 = vrcp.pop %v1113
        %v1188 = vmul.f32 1.0, %v1187
        %v1189 = vrcp.pop %v1114
        %v1190 = vmul.f32 1.0, %v1189
        %v1191 = vrcp.pop %v1115
        %v1192 = vmul.f32 1.0, %v1191
        %v1193 = vrcp.pop %v1116
        %v1194 = vmul.f32 1.0, %v1193
        %v1195 = vrcp.pop %v1117
        %v1196 = vmul.f32 1.0, %v1195
        %v1197 = vrcp.pop %v1118
        %v1198 = vmul.f32 1.0, %v1197
        %v1199 = vrcp.pop %v1119
        %v1200 = vmul.f32 1.0, %v1199
        %v1201 = vrcp.pop %v1120
        %v1202 = vmul.f32 1.0, %v1201
        %v1203 = vrcp.pop %v1121
        %v1204 = vmul.f32 1.0, %v1203
        %v1205 = vrcp.pop %v1122
        %v1206 = vmul.f32 1.0, %v1205
        %v1207 = vrcp.pop %v1123
        %v1208 = vmul.f32 1.0, %v1207
        %v1209 = vrcp.pop %v1124
        %v1210 = vmul.f32 1.0, %v1209
        %v1211 = vrcp.pop %v1125
        %v1212 = vmul.f32 1.0, %v1211
        %v1213 = vrcp.pop %v1126
        %v1214 = vmul.f32 1.0, %v1213
        %v1215 = vrcp.pop %v1127
        %v1216 = vmul.f32 1.0, %v1215
        %v1217 = vrcp.pop %v1128
        %v1218 = vmul.f32 1.0, %v1217
        %v1219 = vrcp.pop %v1129
        %v1220 = vmul.f32 1.0, %v1219
        %v1221 = vrcp.pop %v1130
        %v1222 = vmul.f32 1.0, %v1221
        %v1223 = vrcp.pop %v1131
        %v1224 = vmul.f32 1.0, %v1223
        %v1225 = vrcp.pop %v1132
        %v1226 = vmul.f32 1.0, %v1225
        %v1227 = vrcp.pop %v1133
        %v1228 = vmul.f32 1.0, %v1227
        %v1229 = vrcp.pop %v1134
        %v1230 = vmul.f32 1.0, %v1229
        %v1231 = vrcp.pop %v1135
        %v1232 = vmul.f32 1.0, %v1231
        %v1233 = vrcp.pop %v1136
        %v1234 = vmul.f32 1.0, %v1233
        %v1235 = vrcp.pop %v1137
        %v1236 = vmul.f32 1.0, %v1235
        %v1237 = vrcp.pop %v1138
        %v1238 = vmul.f32 1.0, %v1237
        %v1239 = vrcp.pop %v1139
        %v1240 = vmul.f32 1.0, %v1239
        %v1241 = vrcp.pop %v1140
        %v1242 = vmul.f32 1.0, %v1241
        %v1243 = vrcp.pop %v1141
        %v1244 = vmul.f32 1.0, %v1243
        %v1245 = vrcp.pop %v1142
        %v1246 = vmul.f32 1.0, %v1245
        %v1247 = vrcp.pop %v1143
        %v1248 = vmul.f32 1.0, %v1247
        %v1249 = vrcp.pop %v1144
        %v1250 = vmul.f32 1.0, %v1249
        %v1251 = vrcp.pop %v1145
        %v1252 = vmul.f32 1.0, %v1251
        %v1253 = vrcp.pop %v1146
        %v1254 = vmul.f32 1.0, %v1253
        %v1255 = vrcp.pop %v1147
        %v1256 = vmul.f32 1.0, %v1255
        %v1257 = vrcp.pop %v1148
        %v1258 = vmul.f32 1.0, %v1257
        %v1259 = vrcp.pop %v1149
        %v1260 = vmul.f32 1.0, %v1259
        %v1261 = vrcp.pop %v1150
        %v1262 = vmul.f32 1.0, %v1261
        %v1263 = vrcp.pop %v1151
        %v1264 = vmul.f32 1.0, %v1263
        %v1265 = vrcp.pop %v1152
        %v1266 = vmul.f32 1.0, %v1265
        %v1267 = vrcp.pop %v1153
        %v1268 = vmul.f32 1.0, %v1267
        %v1269 = vrcp.pop %v1154
        %v1270 = vmul.f32 1.0, %v1269
        %v1271 = vrcp.pop %v1155
        %v1272 = vmul.f32 1.0, %v1271
        %v1273 = vrcp.pop %v1156
        %v1274 = vmul.f32 1.0, %v1273
        %v1275 = vrcp.pop %v1157
        %v1276 = vmul.f32 1.0, %v1275
        %v1277 = vrcp.pop %v1158
        %v1278 = vmul.f32 1.0, %v1277
        %v1279 = vrcp.pop %v1159
        %v1280 = vmul.f32 1.0, %v1279
        %v1281 = vrcp.pop %v1160
        %v1282 = vmul.f32 1.0, %v1281
        %v1283 = vrcp.pop %v1161
        %v1284 = vmul.f32 1.0, %v1283
        %v1285 = vrcp.pop %v1162
        %v1286 = vmul.f32 1.0, %v1285
        %v1287 = vrcp.pop %v1163
        %v1288 = vmul.f32 1.0, %v1287
        %v1289 = vrcp.pop %v1164
        %v1290 = vmul.f32 1.0, %v1289
        %v1291 = vrcp.pop %v1165
        %v1292 = vmul.f32 1.0, %v1291
        %v1293 = vrcp.pop %v1166
        %v1294 = vmul.f32 1.0, %v1293
        %v1295 = vmul.f32 %v431, %v1168
        %v1296 = vmul.f32 %v433, %v1170
        %v1297 = vmul.f32 %v437, %v1172
        %v1298 = vmul.f32 %v439, %v1174
        %v1299 = vmul.f32 %v443, %v1176
        %v1300 = vmul.f32 %v445, %v1178
        %v1301 = vmul.f32 %v449, %v1180
        %v1302 = vmul.f32 %v451, %v1182
        %v1303 = vmul.f32 %v455, %v1184
        %v1304 = vmul.f32 %v457, %v1186
        %v1305 = vmul.f32 %v461, %v1188
        %v1306 = vmul.f32 %v463, %v1190
        %v1307 = vmul.f32 %v467, %v1192
        %v1308 = vmul.f32 %v469, %v1194
        %v1309 = vmul.f32 %v473, %v1196
        %v1310 = vmul.f32 %v475, %v1198
        %v1311 = vmul.f32 %v479, %v1200
        %v1312 = vmul.f32 %v481, %v1202
        %v1313 = vmul.f32 %v485, %v1204
        %v1314 = vmul.f32 %v487, %v1206
        %v1315 = vmul.f32 %v491, %v1208
        %v1316 = vmul.f32 %v493, %v1210
        %v1317 = vmul.f32 %v497, %v1212
        %v1318 = vmul.f32 %v499, %v1214
        %v1319 = vmul.f32 %v503, %v1216
        %v1320 = vmul.f32 %v505, %v1218
        %v1321 = vmul.f32 %v509, %v1220
        %v1322 = vmul.f32 %v511, %v1222
        %v1323 = vmul.f32 %v515, %v1224
        %v1324 = vmul.f32 %v517, %v1226
        %v1325 = vmul.f32 %v521, %v1228
        %v1326 = vmul.f32 %v523, %v1230
        %v1327 = vmul.f32 %v527, %v1232
        %v1328 = vmul.f32 %v529, %v1234
        %v1329 = vmul.f32 %v533, %v1236
        %v1330 = vmul.f32 %v535, %v1238
        %v1331 = vmul.f32 %v539, %v1240
        %v1332 = vmul.f32 %v541, %v1242
        %v1333 = vmul.f32 %v545, %v1244
        %v1334 = vmul.f32 %v547, %v1246
        %v1335 = vmul.f32 %v551, %v1248
        %v1336 = vmul.f32 %v553, %v1250
        %v1337 = vmul.f32 %v557, %v1252
        %v1338 = vmul.f32 %v559, %v1254
        %v1339 = vmul.f32 %v563, %v1256
        %v1340 = vmul.f32 %v565, %v1258
        %v1341 = vmul.f32 %v569, %v1260
        %v1342 = vmul.f32 %v571, %v1262
        %v1343 = vmul.f32 %v575, %v1264
        %v1344 = vmul.f32 %v577, %v1266
        %v1345 = vmul.f32 %v581, %v1268
        %v1346 = vmul.f32 %v583, %v1270
        %v1347 = vmul.f32 %v587, %v1272
        %v1348 = vmul.f32 %v589, %v1274
        %v1349 = vmul.f32 %v593, %v1276
        %v1350 = vmul.f32 %v595, %v1278
        %v1351 = vmul.f32 %v599, %v1280
        %v1352 = vmul.f32 %v601, %v1282
        %v1353 = vmul.f32 %v605, %v1284
        %v1354 = vmul.f32 %v607, %v1286
        %v1355 = vmul.f32 %v611, %v1288
        %v1356 = vmul.f32 %v613, %v1290
        %v1357 = vmul.f32 %v617, %v1292
        %v1358 = vmul.f32 %v619, %v1294
        %v1359 = vmul.f32 %v1295, %v721
        %v1360 = vmul.f32 %v1296, %v723
        %v1361 = vmul.f32 %v1297, %v727
        %v1362 = vmul.f32 %v1298, %v729
        %v1363 = vmul.f32 %v1299, %v733
        %v1364 = vmul.f32 %v1300, %v735
        %v1365 = vmul.f32 %v1301, %v739
        %v1366 = vmul.f32 %v1302, %v741
        %v1367 = vmul.f32 %v1303, %v745
        %v1368 = vmul.f32 %v1304, %v747
        %v1369 = vmul.f32 %v1305, %v751
        %v1370 = vmul.f32 %v1306, %v753
        %v1371 = vmul.f32 %v1307, %v757
        %v1372 = vmul.f32 %v1308, %v759
        %v1373 = vmul.f32 %v1309, %v763
        %v1374 = vmul.f32 %v1310, %v765
        %v1375 = vmul.f32 %v1311, %v769
        %v1376 = vmul.f32 %v1312, %v771
        %v1377 = vmul.f32 %v1313, %v775
        %v1378 = vmul.f32 %v1314, %v777
        %v1379 = vmul.f32 %v1315, %v781
        %v1380 = vmul.f32 %v1316, %v783
        %v1381 = vmul.f32 %v1317, %v787
        %v1382 = vmul.f32 %v1318, %v789
        %v1383 = vmul.f32 %v1319, %v793
        %v1384 = vmul.f32 %v1320, %v795
        %v1385 = vmul.f32 %v1321, %v799
        %v1386 = vmul.f32 %v1322, %v801
        %v1387 = vmul.f32 %v1323, %v805
        %v1388 = vmul.f32 %v1324, %v807
        %v1389 = vmul.f32 %v1325, %v811
        %v1390 = vmul.f32 %v1326, %v813
        %v1391 = vmul.f32 %v1327, %v817
        %v1392 = vmul.f32 %v1328, %v819
        %v1393 = vmul.f32 %v1329, %v823
        %v1394 = vmul.f32 %v1330, %v825
        %v1395 = vmul.f32 %v1331, %v829
        %v1396 = vmul.f32 %v1332, %v831
        %v1397 = vmul.f32 %v1333, %v835
        %v1398 = vmul.f32 %v1334, %v837
        %v1399 = vmul.f32 %v1335, %v841
        %v1400 = vmul.f32 %v1336, %v843
        %v1401 = vmul.f32 %v1337, %v847
        %v1402 = vmul.f32 %v1338, %v849
        %v1403 = vmul.f32 %v1339, %v853
        %v1404 = vmul.f32 %v1340, %v855
        %v1405 = vmul.f32 %v1341, %v859
        %v1406 = vmul.f32 %v1342, %v861
        %v1407 = vmul.f32 %v1343, %v865
        %v1408 = vmul.f32 %v1344, %v867
        %v1409 = vmul.f32 %v1345, %v871
        %v1410 = vmul.f32 %v1346, %v873
        %v1411 = vmul.f32 %v1347, %v877
        %v1412 = vmul.f32 %v1348, %v879
        %v1413 = vmul.f32 %v1349, %v883
        %v1414 = vmul.f32 %v1350, %v885
        %v1415 = vmul.f32 %v1351, %v889
        %v1416 = vmul.f32 %v1352, %v891
        %v1417 = vmul.f32 %v1353, %v895
        %v1418 = vmul.f32 %v1354, %v897
        %v1419 = vmul.f32 %v1355, %v901
        %v1420 = vmul.f32 %v1356, %v903
        %v1421 = vmul.f32 %v1357, %v907
        %v1422 = vmul.f32 %v1358, %v909
        %v1423 = vld [vmem:[%s251] sm:$0xff]
        %v1424 = vld [vmem:[%s251 + $0x8] sm:$0xff]
        %v1425 = vld [vmem:[%s251 + $0x10] sm:$0xff]
        %v1426 = vld [vmem:[%s251 + $0x18] sm:$0xff]
        %v1427 = vld [vmem:[%s251 + $0x20] sm:$0xff]
        %v1428 = vld [vmem:[%s251 + $0x28] sm:$0xff]
        %v1429 = vld [vmem:[%s251 + $0x30] sm:$0xff]
        %v1430 = vld [vmem:[%s251 + $0x38] sm:$0xff]
        %v1431 = vld [vmem:[%s251 + $0x40] sm:$0xff]
        %v1432 = vld [vmem:[%s251 + $0x48] sm:$0xff]
        %v1433 = vld [vmem:[%s251 + $0x50] sm:$0xff]
        %v1434 = vld [vmem:[%s251 + $0x58] sm:$0xff]
        %v1435 = vld [vmem:[%s251 + $0x60] sm:$0xff]
        %v1436 = vld [vmem:[%s251 + $0x68] sm:$0xff]
        %v1437 = vld [vmem:[%s251 + $0x70] sm:$0xff]
        %v1438 = vld [vmem:[%s251 + $0x78] sm:$0xff]
        %v1439 = vld [vmem:[%s251 + $0x80] sm:$0xff]
        %v1440 = vld [vmem:[%s251 + $0x88] sm:$0xff]
        %v1441 = vld [vmem:[%s251 + $0x90] sm:$0xff]
        %v1442 = vld [vmem:[%s251 + $0x98] sm:$0xff]
        %v1443 = vld [vmem:[%s251 + $0xa0] sm:$0xff]
        %v1444 = vld [vmem:[%s251 + $0xa8] sm:$0xff]
        %v1445 = vld [vmem:[%s251 + $0xb0] sm:$0xff]
        %v1446 = vld [vmem:[%s251 + $0xb8] sm:$0xff]
        %v1447 = vld [vmem:[%s251 + $0xc0] sm:$0xff]
        %v1448 = vld [vmem:[%s251 + $0xc8] sm:$0xff]
        %v1449 = vld [vmem:[%s251 + $0xd0] sm:$0xff]
        %v1450 = vld [vmem:[%s251 + $0xd8] sm:$0xff]
        %v1451 = vld [vmem:[%s251 + $0xe0] sm:$0xff]
        %v1452 = vld [vmem:[%s251 + $0xe8] sm:$0xff]
        %v1453 = vld [vmem:[%s251 + $0xf0] sm:$0xff]
        %v1454 = vld [vmem:[%s251 + $0xf8] sm:$0xff]
        %v1455 = vld [vmem:[#allocation7] sm:$0xff]
        %v1456 = vld [vmem:[#allocation7 + $0x8] sm:$0xff]
        %v1457 = vld [vmem:[#allocation7 + $0x10] sm:$0xff]
        %v1458 = vld [vmem:[#allocation7 + $0x18] sm:$0xff]
        %v1459 = vld [vmem:[#allocation7 + $0x20] sm:$0xff]
        %v1460 = vld [vmem:[#allocation7 + $0x28] sm:$0xff]
        %v1461 = vld [vmem:[#allocation7 + $0x30] sm:$0xff]
        %v1462 = vld [vmem:[#allocation7 + $0x38] sm:$0xff]
        %v1463 = vld [vmem:[#allocation7 + $0x40] sm:$0xff]
        %v1464 = vld [vmem:[#allocation7 + $0x48] sm:$0xff]
        %v1465 = vld [vmem:[#allocation7 + $0x50] sm:$0xff]
        %v1466 = vld [vmem:[#allocation7 + $0x58] sm:$0xff]
        %v1467 = vld [vmem:[#allocation7 + $0x60] sm:$0xff]
        %v1468 = vld [vmem:[#allocation7 + $0x68] sm:$0xff]
        %v1469 = vld [vmem:[#allocation7 + $0x70] sm:$0xff]
        %v1470 = vld [vmem:[#allocation7 + $0x78] sm:$0xff]
        %v1471 = vld [vmem:[#allocation7 + $0x80] sm:$0xff]
        %v1472 = vld [vmem:[#allocation7 + $0x88] sm:$0xff]
        %v1473 = vld [vmem:[#allocation7 + $0x90] sm:$0xff]
        %v1474 = vld [vmem:[#allocation7 + $0x98] sm:$0xff]
        %v1475 = vld [vmem:[#allocation7 + $0xa0] sm:$0xff]
        %v1476 = vld [vmem:[#allocation7 + $0xa8] sm:$0xff]
        %v1477 = vld [vmem:[#allocation7 + $0xb0] sm:$0xff]
        %v1478 = vld [vmem:[#allocation7 + $0xb8] sm:$0xff]
        %v1479 = vld [vmem:[#allocation7 + $0xc0] sm:$0xff]
        %v1480 = vld [vmem:[#allocation7 + $0xc8] sm:$0xff]
        %v1481 = vld [vmem:[#allocation7 + $0xd0] sm:$0xff]
        %v1482 = vld [vmem:[#allocation7 + $0xd8] sm:$0xff]
        %v1483 = vld [vmem:[#allocation7 + $0xe0] sm:$0xff]
        %v1484 = vld [vmem:[#allocation7 + $0xe8] sm:$0xff]
        %v1485 = vld [vmem:[#allocation7 + $0xf0] sm:$0xff]
        %v1486 = vld [vmem:[#allocation7 + $0xf8] sm:$0xff]
        %1487 = vmatprep.subr.mxu0 0.0
        %1488 = vmatpush1.msra.mxu0 %v1470
        %1489 = vmatprep.subr.mxu0 0.0
        %1490 = vmatpush1.msra.mxu0 %v1469
        %1491 = vmatprep.subr.mxu0 0.0
        %1492 = vmatpush1.msra.mxu0 %v1468
        %1493 = vmatprep.subr.mxu0 0.0
        %1494 = vmatpush1.msra.mxu0 %v1467
        %1495 = vmatprep.subr.mxu0 0.0
        %1496 = vmatpush1.msra.mxu0 %v1466
        %1497 = vmatprep.subr.mxu0 0.0
        %1498 = vmatpush1.msra.mxu0 %v1465
        %1499 = vmatprep.subr.mxu0 0.0
        %1500 = vmatpush1.msra.mxu0 %v1464
        %1501 = vmatprep.subr.mxu0 0.0
        %1502 = vmatpush1.msra.mxu0 %v1463
        %1503 = vmatprep.subr.mxu0 0.0
        %1504 = vmatpush1.msra.mxu0 %v1462
        %1505 = vmatprep.subr.mxu0 0.0
        %1506 = vmatpush1.msra.mxu0 %v1461
        %1507 = vmatprep.subr.mxu0 0.0
        %1508 = vmatpush1.msra.mxu0 %v1460
        %1509 = vmatprep.subr.mxu0 0.0
        %1510 = vmatpush1.msra.mxu0 %v1459
        %1511 = vmatprep.subr.mxu0 0.0
        %1512 = vmatpush1.msra.mxu0 %v1458
        %1513 = vmatprep.subr.mxu0 0.0
        %1514 = vmatpush1.msra.mxu0 %v1457
        %1515 = vmatprep.subr.mxu0 0.0
        %1516 = vmatpush1.msra.mxu0 %v1456
        %1517 = vmatprep.subr.mxu0 0.0
        %1518 = vmatpush1.msra.mxu0 %v1455
        %1519 = vmatprep.subr.mxu0 0.0
        %1520 = vmatpush2.msra.mxu0 %v1486
        %1521 = vmatprep.subr.mxu0 0.0
        %1522 = vmatpush2.msra.mxu0 %v1485
        %1523 = vmatprep.subr.mxu0 0.0
        %1524 = vmatpush2.msra.mxu0 %v1484
        %1525 = vmatprep.subr.mxu0 0.0
        %1526 = vmatpush2.msra.mxu0 %v1483
        %1527 = vmatprep.subr.mxu0 0.0
        %1528 = vmatpush2.msra.mxu0 %v1482
        %1529 = vmatprep.subr.mxu0 0.0
        %1530 = vmatpush2.msra.mxu0 %v1481
        %1531 = vmatprep.subr.mxu0 0.0
        %1532 = vmatpush2.msra.mxu0 %v1480
        %1533 = vmatprep.subr.mxu0 0.0
        %1534 = vmatpush2.msra.mxu0 %v1479
        %1535 = vmatprep.subr.mxu0 0.0
        %1536 = vmatpush2.msra.mxu0 %v1478
        %1537 = vmatprep.subr.mxu0 0.0
        %1538 = vmatpush2.msra.mxu0 %v1477
        %1539 = vmatprep.subr.mxu0 0.0
        %1540 = vmatpush2.msra.mxu0 %v1476
        %1541 = vmatprep.subr.mxu0 0.0
        %1542 = vmatpush2.msra.mxu0 %v1475
        %1543 = vmatprep.subr.mxu0 0.0
        %1544 = vmatpush2.msra.mxu0 %v1474
        %1545 = vmatprep.subr.mxu0 0.0
        %1546 = vmatpush2.msra.mxu0 %v1473
        %1547 = vmatprep.subr.mxu0 0.0
        %1548 = vmatpush2.msra.mxu0 %v1472
        %1549 = vmatprep.subr.mxu0 0.0
        %1550 = vmatpush2.msra.mxu0 %v1471
        %1551 = vmatprep.mubr.f32.mxu0 %v1360
        %1552 = vmatmul.mubr.f32.gmra.mxu0 %v1359
        %v1553 = vpop.f32.mrf.mxu0
        %v1554 = vadd.f32 0.0, %v1553
        %v1555 = vpop.f32.mrf.mxu0
        %1556 = vmatprep.mubr.f32.mxu0 %v1362
        %1557 = vmatmul.mubr.f32.gmra.mxu0 %v1361
        %v1558 = vpop.f32.mrf.mxu0
        %v1559 = vadd.f32 0.0, %v1558
        %v1560 = vpop.f32.mrf.mxu0
        %1561 = vmatprep.mubr.f32.mxu0 %v1364
        %1562 = vmatmul.mubr.f32.gmra.mxu0 %v1363
        %v1563 = vpop.f32.mrf.mxu0
        %v1564 = vadd.f32 0.0, %v1563
        %v1565 = vpop.f32.mrf.mxu0
        %1566 = vmatprep.mubr.f32.mxu0 %v1366
        %1567 = vmatmul.mubr.f32.gmra.mxu0 %v1365
        %v1568 = vpop.f32.mrf.mxu0
        %v1569 = vadd.f32 0.0, %v1568
        %v1570 = vpop.f32.mrf.mxu0
        %1571 = vmatprep.mubr.f32.mxu0 %v1368
        %1572 = vmatmul.mubr.f32.gmra.mxu0 %v1367
        %v1573 = vpop.f32.mrf.mxu0
        %v1574 = vadd.f32 0.0, %v1573
        %v1575 = vpop.f32.mrf.mxu0
        %1576 = vmatprep.mubr.f32.mxu0 %v1370
        %1577 = vmatmul.mubr.f32.gmra.mxu0 %v1369
        %v1578 = vpop.f32.mrf.mxu0
        %v1579 = vadd.f32 0.0, %v1578
        %v1580 = vpop.f32.mrf.mxu0
        %1581 = vmatprep.mubr.f32.mxu0 %v1372
        %1582 = vmatmul.mubr.f32.gmra.mxu0 %v1371
        %v1583 = vpop.f32.mrf.mxu0
        %v1584 = vadd.f32 0.0, %v1583
        %v1585 = vpop.f32.mrf.mxu0
        %1586 = vmatprep.mubr.f32.mxu0 %v1374
        %1587 = vmatmul.mubr.f32.gmra.mxu0 %v1373
        %v1588 = vpop.f32.mrf.mxu0
        %v1589 = vadd.f32 0.0, %v1588
        %v1590 = vpop.f32.mrf.mxu0
        %1591 = vmatprep.mubr.f32.mxu0 %v1376
        %1592 = vmatmul.mubr.f32.gmra.mxu0 %v1375
        %v1593 = vpop.f32.mrf.mxu0
        %v1594 = vadd.f32 0.0, %v1593
        %v1595 = vpop.f32.mrf.mxu0
        %1596 = vmatprep.mubr.f32.mxu0 %v1378
        %1597 = vmatmul.mubr.f32.gmra.mxu0 %v1377
        %v1598 = vpop.f32.mrf.mxu0
        %v1599 = vadd.f32 0.0, %v1598
        %v1600 = vpop.f32.mrf.mxu0
        %1601 = vmatprep.mubr.f32.mxu0 %v1380
        %1602 = vmatmul.mubr.f32.gmra.mxu0 %v1379
        %v1603 = vpop.f32.mrf.mxu0
        %v1604 = vadd.f32 0.0, %v1603
        %v1605 = vpop.f32.mrf.mxu0
        %1606 = vmatprep.mubr.f32.mxu0 %v1382
        %1607 = vmatmul.mubr.f32.gmra.mxu0 %v1381
        %v1608 = vpop.f32.mrf.mxu0
        %v1609 = vadd.f32 0.0, %v1608
        %v1610 = vpop.f32.mrf.mxu0
        %1611 = vmatprep.mubr.f32.mxu0 %v1384
        %1612 = vmatmul.mubr.f32.gmra.mxu0 %v1383
        %v1613 = vpop.f32.mrf.mxu0
        %v1614 = vadd.f32 0.0, %v1613
        %v1615 = vpop.f32.mrf.mxu0
        %1616 = vmatprep.mubr.f32.mxu0 %v1386
        %1617 = vmatmul.mubr.f32.gmra.mxu0 %v1385
        %v1618 = vpop.f32.mrf.mxu0
        %v1619 = vadd.f32 0.0, %v1618
        %v1620 = vpop.f32.mrf.mxu0
        %1621 = vmatprep.mubr.f32.mxu0 %v1388
        %1622 = vmatmul.mubr.f32.gmra.mxu0 %v1387
        %v1623 = vpop.f32.mrf.mxu0
        %v1624 = vadd.f32 0.0, %v1623
        %v1625 = vpop.f32.mrf.mxu0
        %1626 = vmatprep.mubr.f32.mxu0 %v1390
        %1627 = vmatmul.mubr.f32.gmra.mxu0 %v1389
        %v1628 = vpop.f32.mrf.mxu0
        %v1629 = vadd.f32 0.0, %v1628
        %v1630 = vpop.f32.mrf.mxu0
        %1631 = vmatprep.mubr.f32.mxu0 %v1392
        %1632 = vmatmul.mubr.f32.gmra.mxu0 %v1391
        %v1633 = vpop.f32.mrf.mxu0
        %v1634 = vadd.f32 0.0, %v1633
        %v1635 = vpop.f32.mrf.mxu0
        %1636 = vmatprep.mubr.f32.mxu0 %v1394
        %1637 = vmatmul.mubr.f32.gmra.mxu0 %v1393
        %v1638 = vpop.f32.mrf.mxu0
        %v1639 = vadd.f32 0.0, %v1638
        %v1640 = vpop.f32.mrf.mxu0
        %1641 = vmatprep.mubr.f32.mxu0 %v1396
        %1642 = vmatmul.mubr.f32.gmra.mxu0 %v1395
        %v1643 = vpop.f32.mrf.mxu0
        %v1644 = vadd.f32 0.0, %v1643
        %v1645 = vpop.f32.mrf.mxu0
        %1646 = vmatprep.mubr.f32.mxu0 %v1398
        %1647 = vmatmul.mubr.f32.gmra.mxu0 %v1397
        %v1648 = vpop.f32.mrf.mxu0
        %v1649 = vadd.f32 0.0, %v1648
        %v1650 = vpop.f32.mrf.mxu0
        %1651 = vmatprep.mubr.f32.mxu0 %v1400
        %1652 = vmatmul.mubr.f32.gmra.mxu0 %v1399
        %v1653 = vpop.f32.mrf.mxu0
        %v1654 = vadd.f32 0.0, %v1653
        %v1655 = vpop.f32.mrf.mxu0
        %1656 = vmatprep.mubr.f32.mxu0 %v1402
        %1657 = vmatmul.mubr.f32.gmra.mxu0 %v1401
        %v1658 = vpop.f32.mrf.mxu0
        %v1659 = vadd.f32 0.0, %v1658
        %v1660 = vpop.f32.mrf.mxu0
        %1661 = vmatprep.mubr.f32.mxu0 %v1404
        %1662 = vmatmul.mubr.f32.gmra.mxu0 %v1403
        %v1663 = vpop.f32.mrf.mxu0
        %v1664 = vadd.f32 0.0, %v1663
        %v1665 = vpop.f32.mrf.mxu0
        %1666 = vmatprep.mubr.f32.mxu0 %v1406
        %1667 = vmatmul.mubr.f32.gmra.mxu0 %v1405
        %v1668 = vpop.f32.mrf.mxu0
        %v1669 = vadd.f32 0.0, %v1668
        %v1670 = vpop.f32.mrf.mxu0
        %1671 = vmatprep.mubr.f32.mxu0 %v1408
        %1672 = vmatmul.mubr.f32.gmra.mxu0 %v1407
        %v1673 = vpop.f32.mrf.mxu0
        %v1674 = vadd.f32 0.0, %v1673
        %v1675 = vpop.f32.mrf.mxu0
        %1676 = vmatprep.mubr.f32.mxu0 %v1410
        %1677 = vmatmul.mubr.f32.gmra.mxu0 %v1409
        %v1678 = vpop.f32.mrf.mxu0
        %v1679 = vadd.f32 0.0, %v1678
        %v1680 = vpop.f32.mrf.mxu0
        %1681 = vmatprep.mubr.f32.mxu0 %v1412
        %1682 = vmatmul.mubr.f32.gmra.mxu0 %v1411
        %v1683 = vpop.f32.mrf.mxu0
        %v1684 = vadd.f32 0.0, %v1683
        %v1685 = vpop.f32.mrf.mxu0
        %1686 = vmatprep.mubr.f32.mxu0 %v1414
        %1687 = vmatmul.mubr.f32.gmra.mxu0 %v1413
        %v1688 = vpop.f32.mrf.mxu0
        %v1689 = vadd.f32 0.0, %v1688
        %v1690 = vpop.f32.mrf.mxu0
        %1691 = vmatprep.mubr.f32.mxu0 %v1416
        %1692 = vmatmul.mubr.f32.gmra.mxu0 %v1415
        %v1693 = vpop.f32.mrf.mxu0
        %v1694 = vadd.f32 0.0, %v1693
        %v1695 = vpop.f32.mrf.mxu0
        %1696 = vmatprep.mubr.f32.mxu0 %v1418
        %1697 = vmatmul.mubr.f32.gmra.mxu0 %v1417
        %v1698 = vpop.f32.mrf.mxu0
        %v1699 = vadd.f32 0.0, %v1698
        %v1700 = vpop.f32.mrf.mxu0
        %1701 = vmatprep.mubr.f32.mxu0 %v1420
        %1702 = vmatmul.mubr.f32.gmra.mxu0 %v1419
        %v1703 = vpop.f32.mrf.mxu0
        %v1704 = vadd.f32 0.0, %v1703
        %v1705 = vpop.f32.mrf.mxu0
        %1706 = vmatprep.mubr.f32.mxu0 %v1422
        %1707 = vmatmul.mubr.f32.gmra.mxu0 %v1421
        %v1708 = vpop.f32.mrf.mxu0
        %v1709 = vadd.f32 0.0, %v1708
        %v1710 = vpop.f32.mrf.mxu0
        %1711 = vdwg.mxu0
        %v1712 = vadd.f32 %v1423, %v1554
        %v1713 = vadd.f32 %v1424, %v1559
        %v1714 = vadd.f32 %v1425, %v1564
        %v1715 = vadd.f32 %v1426, %v1569
        %v1716 = vadd.f32 %v1427, %v1574
        %v1717 = vadd.f32 %v1428, %v1579
        %v1718 = vadd.f32 %v1429, %v1584
        %v1719 = vadd.f32 %v1430, %v1589
        %v1720 = vadd.f32 %v1431, %v1594
        %v1721 = vadd.f32 %v1432, %v1599
        %v1722 = vadd.f32 %v1433, %v1604
        %v1723 = vadd.f32 %v1434, %v1609
        %v1724 = vadd.f32 %v1435, %v1614
        %v1725 = vadd.f32 %v1436, %v1619
        %v1726 = vadd.f32 %v1437, %v1624
        %v1727 = vadd.f32 %v1438, %v1629
        %v1728 = vadd.f32 %v1439, %v1634
        %v1729 = vadd.f32 %v1440, %v1639
        %v1730 = vadd.f32 %v1441, %v1644
        %v1731 = vadd.f32 %v1442, %v1649
        %v1732 = vadd.f32 %v1443, %v1654
        %v1733 = vadd.f32 %v1444, %v1659
        %v1734 = vadd.f32 %v1445, %v1664
        %v1735 = vadd.f32 %v1446, %v1669
        %v1736 = vadd.f32 %v1447, %v1674
        %v1737 = vadd.f32 %v1448, %v1679
        %v1738 = vadd.f32 %v1449, %v1684
        %v1739 = vadd.f32 %v1450, %v1689
        %v1740 = vadd.f32 %v1451, %v1694
        %v1741 = vadd.f32 %v1452, %v1699
        %v1742 = vadd.f32 %v1453, %v1704
        %v1743 = vadd.f32 %v1454, %v1709
        %1744 = vst [vmem:[%s251] sm:$0xff] %v1712
        %1745 = vst [vmem:[%s251 + $0x8] sm:$0xff] %v1713
        %1746 = vst [vmem:[%s251 + $0x10] sm:$0xff] %v1714
        %1747 = vst [vmem:[%s251 + $0x18] sm:$0xff] %v1715
        %1748 = vst [vmem:[%s251 + $0x20] sm:$0xff] %v1716
        %1749 = vst [vmem:[%s251 + $0x28] sm:$0xff] %v1717
        %1750 = vst [vmem:[%s251 + $0x30] sm:$0xff] %v1718
        %1751 = vst [vmem:[%s251 + $0x38] sm:$0xff] %v1719
        %1752 = vst [vmem:[%s251 + $0x40] sm:$0xff] %v1720
        %1753 = vst [vmem:[%s251 + $0x48] sm:$0xff] %v1721
        %1754 = vst [vmem:[%s251 + $0x50] sm:$0xff] %v1722
        %1755 = vst [vmem:[%s251 + $0x58] sm:$0xff] %v1723
        %1756 = vst [vmem:[%s251 + $0x60] sm:$0xff] %v1724
        %1757 = vst [vmem:[%s251 + $0x68] sm:$0xff] %v1725
        %1758 = vst [vmem:[%s251 + $0x70] sm:$0xff] %v1726
        %1759 = vst [vmem:[%s251 + $0x78] sm:$0xff] %v1727
        %1760 = vst [vmem:[%s251 + $0x80] sm:$0xff] %v1728
        %1761 = vst [vmem:[%s251 + $0x88] sm:$0xff] %v1729
        %1762 = vst [vmem:[%s251 + $0x90] sm:$0xff] %v1730
        %1763 = vst [vmem:[%s251 + $0x98] sm:$0xff] %v1731
        %1764 = vst [vmem:[%s251 + $0xa0] sm:$0xff] %v1732
        %1765 = vst [vmem:[%s251 + $0xa8] sm:$0xff] %v1733
        %1766 = vst [vmem:[%s251 + $0xb0] sm:$0xff] %v1734
        %1767 = vst [vmem:[%s251 + $0xb8] sm:$0xff] %v1735
        %1768 = vst [vmem:[%s251 + $0xc0] sm:$0xff] %v1736
        %1769 = vst [vmem:[%s251 + $0xc8] sm:$0xff] %v1737
        %1770 = vst [vmem:[%s251 + $0xd0] sm:$0xff] %v1738
        %1771 = vst [vmem:[%s251 + $0xd8] sm:$0xff] %v1739
        %1772 = vst [vmem:[%s251 + $0xe0] sm:$0xff] %v1740
        %1773 = vst [vmem:[%s251 + $0xe8] sm:$0xff] %v1741
        %1774 = vst [vmem:[%s251 + $0xf0] sm:$0xff] %v1742
        %1775 = vst [vmem:[%s251 + $0xf8] sm:$0xff] %v1743
        %s1776 = sand.u32 %s119, 1
        %s1777 = scalar_lea.sflag [#allocation4], %s1776
        %s1778 = sand.u32 %s119, 1
        %s1779 = smul.addr %s1778, 256
        %s1780 = scalar_lea.vmem [#allocation8], %s1779
        // Predicated region
        $region49: #{feed_forward_prepared.1} parent=31 // pred_check
          %p1781 = pneg %p129
        $region50: #{feed_forward_prepared.1} parent=31 // pred_check_branch
          %1783 = sbr.rel (%p1781) target = $region52
        $region51: #{feed_forward_prepared.1} parent=31 // pred_region
          %s1784 = smul.u32 32, %s25
          %s1785 = ssub.s32 40, %s1784
          %p1786 = scmp.lt.s32.totalorder %s1785, 32
          %s1787 = scalar_select %p1786, %s1785, 32
          %s1788 = smul.u32 128, %s1787
          %s1790 = ssub.s32 4096, %s1788
          %1791 = vsyncadd %s1777, %s1790
          %p1792 = scmp.ne.s32.totalorder 0, %s1788
          %s1793 = smul.addr %s1784, 128
          %s1794 = scalar_lea.hbm %s3, %s1793
          %s1795 = smul.u32 8, %s1787
          %s1796 = sshll.u32 %s1780, 4
          %s1797 = int_to_ptr.vmem [resolvable:$true] %s1796
          %s1798 = sshll.u32 %s1795, 4
          %1802 = dma.vmem_to_hbm [thread:$0]  (%p1792), %s1797, %s1798, %s1794, %s1777, 128, 128, 8
        $region52: #{feed_forward_prepared.1} parent=31 // pred_fallthru
          _
      $region32: #{feed_forward_prepared.1} parent=5 // pred_fallthru
        _
      %p1803 = scmp.le.s32.totalorder 2, %s16
      // Predicated region
      $region53: #{feed_forward_prepared.1} parent=5 // pred_check
        %p1804 = pneg %p1803
      $region54: #{feed_forward_prepared.1} parent=5 // pred_check_branch
        %1806 = sbr.rel (%p1804) target = $region56
      $region55: #{feed_forward_prepared.1} parent=5 // pred_region
        %s1807 = ssub.s32 %s16, 2
        // Predicated region
        $region57: #{feed_forward_prepared.1} parent=55 // pred_check
          %p1808 = pneg %p135
        $region58: #{feed_forward_prepared.1} parent=55 // pred_check_branch
          %1810 = sbr.rel (%p1808) target = $region60
        $region59: #{feed_forward_prepared.1} parent=55 // pred_region
          %s1811 = sand.u32 %s120, 1
          %s1812 = scalar_lea.sflag [#allocation4], %s1811
          %s1813 = sand.u32 %s120, 1
          %s1814 = smul.addr %s1813, 256
          %s1815 = scalar_lea.vmem [#allocation8], %s1814
          %1816 = dma.done %s1812, 4096
        $region60: #{feed_forward_prepared.1} parent=55 // pred_fallthru
          _
      $region56: #{feed_forward_prepared.1} parent=5 // pred_fallthru
        _
    $region6: #{feed_forward_prepared.1} parent=1 // loop_footer
      %s20 = sadd.s32 1, %s16
    $region7: #{feed_forward_prepared.1} parent=1 // loop_footer_branch
      %15 = sbr.rel target = $region3
    $region8: #{feed_forward_prepared.1} parent=1 // loop_exit
      _
    %1817 = vsyncpa [#allocation3], 1
    %s1818 = scalar_lea.sflag [#allocation3], 1
    %1819 = vsyncpa %s1818, 1
    %1820 = vsyncpa [#allocation6], 1
    %1821 = vsyncpa [#allocation4], 1
    %s1822 = scalar_lea.sflag [#allocation4], 1
    %1823 = vsyncpa %s1822, 1

</llo_original>
